<compile_context>
chip_gen: v5e
topology: v5e:2x2
jax: 0.10.0
libtpu: 0.0.40
codegen_flags: <defaults>
</compile_context>

<pallas_src>
import jax
import jax.numpy as jnp
import numpy as np
from jax.experimental import pallas as pl
from jax.experimental.pallas import tpu as pltpu


# ----------------------------- hyper-params ---------------------------------
BATCH = 8
EMBED = 32          # embedding_size
DEC_H = 32          # decoder_hidden_size
ENC_H = 32          # encoder_hidden_size
SRC_LEN = 16        # max_src_length
N_LAYERS = 2        # num_hidden_layers
VOCAB = 64          # output_size

GATE = 128          # lane-tile stride used to align GRU gates / output segments

assert ENC_H == DEC_H, "stacked GRU weight layout assumes encoder_hidden == decoder_hidden"
assert DEC_H <= GATE and VOCAB <= 2 * GATE and SRC_LEN <= GATE


# ------------------------------- kernel -------------------------------------
def attn_decoder_kernel(
    tok_ref,        # [B, 1]  int32 token ids
    emb_tbl_ref,    # [V, E]
    hid_ref,        # [L, B, Hd]
    enc_ref,        # [B, S, He]   (pre-permuted in wrapper)
    w_attn_e_ref,   # [E, S]
    w_attn_h_ref,   # [Hd, S]
    b_attn_ref,     # [1, S]
    w_comb_e_ref,   # [E, He]
    w_comb_a_ref,   # [He, He]
    b_comb_ref,     # [1, He]
    w_ih_ref,       # [L, Hd, 3*GATE]  (gate g at lanes [g*GATE : g*GATE+Hd])
    w_hh_ref,       # [L, Hd, 3*GATE]
    b_ih_ref,       # [L, 1, 3*GATE]
    b_hh_ref,       # [L, 1, 3*GATE]
    w_out_ref,      # [Hd, V]
    b_out_ref,      # [1, V]
    out_ref,        # out: [B, GATE*(2+L)] packed slab
):
    f32 = jnp.float32
    B = tok_ref.shape[0]
    V = emb_tbl_ref.shape[0]
    L = hid_ref.shape[0]
    Hd = hid_ref.shape[2]
    S = enc_ref.shape[1]

    # Zero-init the packed output slab (padding lanes stay 0).
    out_ref[...] = jnp.zeros_like(out_ref)

    # ---- embedding lookup via one-hot matmul (MXU is otherwise idle) ----
    tok = tok_ref[...]                                                  # [B, 1] int32
    vocab_iota = jax.lax.broadcasted_iota(jnp.int32, (B, V), 1)         # [B, V]
    one_hot = (vocab_iota == tok).astype(f32)                           # [B, V]
    emb = jnp.dot(one_hot, emb_tbl_ref[...], preferred_element_type=f32)  # [B, E]
    # dropout: eval-mode identity.

    h0 = hid_ref[0]                                                     # [B, Hd]

    # ---- attention weights: softmax(emb @ We + h0 @ Wh + b) (no lane concat) ----
    attn_logits = (
        jnp.dot(emb, w_attn_e_ref[...], preferred_element_type=f32)
        + jnp.dot(h0, w_attn_h_ref[...], preferred_element_type=f32)
        + b_attn_ref[...]
    )                                                                   # [B, S]
    attn_logits = attn_logits - jnp.max(attn_logits, axis=1, keepdims=True)
    attn_exp = jnp.exp(attn_logits)
    inv_den = pl.reciprocal(jnp.sum(attn_exp, axis=1, keepdims=True), approx=True)
    attn_w = attn_exp * inv_den                                         # [B, S]

    # ---- attn_applied[b,h] = sum_s attn_w[b,s] * enc[b,s,h]  (vectorized bmm) ----
    applied = jnp.sum(attn_w[:, :, None] * enc_ref[...], axis=1)        # [B, He]

    # ---- attn_combine + ReLU (pre-split weights, no lane concat) ----
    x = (
        jnp.dot(emb, w_comb_e_ref[...], preferred_element_type=f32)
        + jnp.dot(applied, w_comb_a_ref[...], preferred_element_type=f32)
        + b_comb_ref[...]
    )
    x = jnp.maximum(x, 0.0)                                             # [B, He]

    # ---- multi-layer GRU, single time step; gates lane-aligned at 128 ----
    for layer in range(L):                                              # static unroll (L=2)
        h_prev = hid_ref[layer]                                         # [B, Hd]
        gi = (
            jnp.dot(x, w_ih_ref[layer], preferred_element_type=f32)
            + b_ih_ref[layer]
        )                                                               # [B, 3*GATE]
        gh = (
            jnp.dot(h_prev, w_hh_ref[layer], preferred_element_type=f32)
            + b_hh_ref[layer]
        )                                                               # [B, 3*GATE]
        i_r = gi[:, 0:Hd];                 h_r = gh[:, 0:Hd]
        i_z = gi[:, GATE:GATE + Hd];       h_z = gh[:, GATE:GATE + Hd]
        i_n = gi[:, 2 * GATE:2 * GATE + Hd]
        h_n = gh[:, 2 * GATE:2 * GATE + Hd]
        r = jax.nn.sigmoid(i_r + h_r)
        z = jax.nn.sigmoid(i_z + h_z)
        n = jnp.tanh(i_n + r * h_n)
        h_new = (1.0 - z) * n + z * h_prev                              # [B, Hd]
        out_ref[:, GATE * (1 + layer):GATE * (1 + layer) + Hd] = h_new
        x = h_new

    # ---- output projection + log_softmax ----
    logits = jnp.dot(x, w_out_ref[...], preferred_element_type=f32) + b_out_ref[...]
    m = jnp.max(logits, axis=1, keepdims=True)
    lse = jnp.log(jnp.sum(jnp.exp(logits - m), axis=1, keepdims=True)) + m
    out_ref[:, 0:V] = logits - lse
    out_ref[:, GATE * (1 + L):GATE * (1 + L) + S] = attn_w


# ------------------------------ wrapper --------------------------------------
def _full_spec(shape):
    nd = len(shape)
    return pl.BlockSpec(shape, lambda i, _nd=nd: (0,) * _nd)


def prepare_params(params):
    """One-time weight re-layout for the kernel (done outside jit)."""
    E, Hd = EMBED, DEC_H
    w_attn = params["w_attn"]               # [E+Hd, S]
    w_comb = params["w_comb"]               # [E+He, He]

    def pad_gates(w, hd):
        # [..., 3*hd] -> [..., 3*GATE] with gate g at lanes [g*GATE : g*GATE+hd].
        pad = [(0, 0)] * (w.ndim - 1) + [(0, GATE - hd)]
        parts = [jnp.pad(w[..., g * hd:(g + 1) * hd], pad) for g in range(3)]
        return jnp.concatenate(parts, axis=-1)

    return {
        "emb_table": params["emb_table"],
        "w_attn_e": w_attn[:E], "w_attn_h": w_attn[E:], "b_attn": params["b_attn"],
        "w_comb_e": w_comb[:E], "w_comb_a": w_comb[E:], "b_comb": params["b_comb"],
        "w_ih": pad_gates(params["w_ih"], Hd),
        "w_hh": pad_gates(params["w_hh"], Hd),
        "b_ih": pad_gates(params["b_ih"], Hd),
        "b_hh": pad_gates(params["b_hh"], Hd),
        "w_out": params["w_out"], "b_out": params["b_out"],
    }


@jax.jit
def attn_decoder_forward(input_tensor, hidden, encoder_outputs, prepped):
    """input_tensor: [1, B] int32; hidden: [L, B, Hd]; encoder_outputs: [S, B, He]."""
    L, B, Hd = hidden.shape
    S = encoder_outputs.shape[0]
    V = prepped["w_out"].shape[1]

    tok = input_tensor.reshape(B, 1).astype(jnp.int32)
    enc_bsh = jnp.transpose(encoder_outputs, (1, 0, 2)).astype(jnp.float32)  # [B,S,He]

    operands = (
        tok,
        prepped["emb_table"],
        hidden.astype(jnp.float32),
        enc_bsh,
        prepped["w_attn_e"], prepped["w_attn_h"], prepped["b_attn"],
        prepped["w_comb_e"], prepped["w_comb_a"], prepped["b_comb"],
        prepped["w_ih"], prepped["w_hh"], prepped["b_ih"], prepped["b_hh"],
        prepped["w_out"], prepped["b_out"],
    )

    slab_w = GATE * (2 + L)
    slab = pl.pallas_call(
        attn_decoder_kernel,
        grid=(1,),
        in_specs=[_full_spec(op.shape) for op in operands],
        out_specs=_full_spec((B, slab_w)),
        out_shape=jax.ShapeDtypeStruct((B, slab_w), jnp.float32),
        compiler_params=pltpu.CompilerParams(dimension_semantics=("arbitrary",)),
    )(*operands)

    logp = slab[:, :V]
    new_hidden = jnp.stack(
        [slab[:, GATE * (1 + l):GATE * (1 + l) + Hd] for l in range(L)], axis=0
    )
    attn_w = slab[:, GATE * (1 + L):GATE * (1 + L) + S]
    return logp, new_hidden, attn_w


# ------------------------ pure-JAX reference (for check) ---------------------
def reference_forward(input_tensor, hidden, encoder_outputs, params):
    emb = jnp.take(params["emb_table"], input_tensor[0], axis=0)        # [B, E]
    attn_in = jnp.concatenate([emb, hidden[0]], axis=1)
    attn_w = jax.nn.softmax(attn_in @ params["w_attn"] + params["b_attn"], axis=1)
    applied = jnp.einsum("bs,sbh->bh", attn_w, encoder_outputs)
    comb_in = jnp.concatenate([emb, applied], axis=1)
    x = jax.nn.relu(comb_in @ params["w_comb"] + params["b_comb"])
    new_hidden = []
    hd = hidden.shape[2]
    for layer in range(hidden.shape[0]):
        h_prev = hidden[layer]
        gi = x @ params["w_ih"][layer] + params["b_ih"][layer]
        gh = h_prev @ params["w_hh"][layer] + params["b_hh"][layer]
        r = jax.nn.sigmoid(gi[:, :hd] + gh[:, :hd])
        z = jax.nn.sigmoid(gi[:, hd:2 * hd] + gh[:, hd:2 * hd])
        n = jnp.tanh(gi[:, 2 * hd:] + r * gh[:, 2 * hd:])
        h_new = (1.0 - z) * n + z * h_prev
        new_hidden.append(h_new)
        x = h_new
    logits = x @ params["w_out"] + params["b_out"]
    logp = jax.nn.log_softmax(logits, axis=1)
    return logp, jnp.stack(new_hidden, axis=0), attn_w


# -------------------------------- main ---------------------------------------
def make_params(key):
    ks = jax.random.split(key, 12)
    scale = 0.1
    return {
        "emb_table": scale * jax.random.normal(ks[0], (VOCAB, EMBED), jnp.float32),
        "w_attn":    scale * jax.random.normal(ks[1], (EMBED + DEC_H, SRC_LEN), jnp.float32),
        "b_attn":    scale * jax.random.normal(ks[2], (1, SRC_LEN), jnp.float32),
        "w_comb":    scale * jax.random.normal(ks[3], (EMBED + ENC_H, ENC_H), jnp.float32),
        "b_comb":    scale * jax.random.normal(ks[4], (1, ENC_H), jnp.float32),
        "w_ih":      scale * jax.random.normal(ks[5], (N_LAYERS, DEC_H, 3 * DEC_H), jnp.float32),
        "w_hh":      scale * jax.random.normal(ks[6], (N_LAYERS, DEC_H, 3 * DEC_H), jnp.float32),
        "b_ih":      scale * jax.random.normal(ks[7], (N_LAYERS, 1, 3 * DEC_H), jnp.float32),
        "b_hh":      scale * jax.random.normal(ks[8], (N_LAYERS, 1, 3 * DEC_H), jnp.float32),
        "w_out":     scale * jax.random.normal(ks[9], (DEC_H, VOCAB), jnp.float32),
        "b_out":     scale * jax.random.normal(ks[10], (1, VOCAB), jnp.float32),
    }


if __name__ == "__main__":
    key = jax.random.PRNGKey(0)
    k_par, k_tok, k_hid, k_enc = jax.random.split(key, 4)

    params = make_params(k_par)
    prepped = prepare_params(params)

    input_tensor = jax.random.randint(k_tok, (1, BATCH), 0, VOCAB, dtype=jnp.int32)
    hidden = 0.1 * jax.random.normal(k_hid, (N_LAYERS, BATCH, DEC_H), jnp.float32)
    encoder_outputs = 0.1 * jax.random.normal(
        k_enc, (SRC_LEN, BATCH, ENC_H), jnp.float32
    )

    logp, new_hidden, attn_w = attn_decoder_forward(
        input_tensor, hidden, encoder_outputs, prepped
    )
    jax.block_until_ready((logp, new_hidden, attn_w))

    # sanity check against pure-JAX reference (uses the original weight layout)
    r_logp, r_hidden, r_attn = reference_forward(
        input_tensor, hidden, encoder_outputs, params
    )
    np.testing.assert_allclose(np.asarray(logp), np.asarray(r_logp), rtol=2e-3, atol=2e-3)
    np.testing.assert_allclose(np.asarray(new_hidden), np.asarray(r_hidden), rtol=2e-3, atol=2e-3)
    np.testing.assert_allclose(np.asarray(attn_w), np.asarray(r_attn), rtol=2e-3, atol=2e-3)

    assert logp.shape == (BATCH, VOCAB)
    assert new_hidden.shape == (N_LAYERS, BATCH, DEC_H)
    assert attn_w.shape == (BATCH, SRC_LEN)
    print("KERNEL_OK")
</pallas_src>

<mosaic_0001>
module attributes {stable_mosaic.version = 11 : i64} {
  func.func @attn_decoder_kernel(%arg0: i32, %arg1: memref<8x1xi32, #tpu.memory_space<vmem>>, %arg2: memref<64x32xf32, #tpu.memory_space<vmem>>, %arg3: memref<2x8x32xf32, #tpu.memory_space<vmem>>, %arg4: memref<8x16x32xf32, #tpu.memory_space<vmem>>, %arg5: memref<32x16xf32, #tpu.memory_space<vmem>>, %arg6: memref<32x16xf32, #tpu.memory_space<vmem>>, %arg7: memref<1x16xf32, #tpu.memory_space<vmem>>, %arg8: memref<32x32xf32, #tpu.memory_space<vmem>>, %arg9: memref<32x32xf32, #tpu.memory_space<vmem>>, %arg10: memref<1x32xf32, #tpu.memory_space<vmem>>, %arg11: memref<2x32x384xf32, #tpu.memory_space<vmem>>, %arg12: memref<2x32x384xf32, #tpu.memory_space<vmem>>, %arg13: memref<2x1x384xf32, #tpu.memory_space<vmem>>, %arg14: memref<2x1x384xf32, #tpu.memory_space<vmem>>, %arg15: memref<32x64xf32, #tpu.memory_space<vmem>>, %arg16: memref<1x64xf32, #tpu.memory_space<vmem>>, %arg17: memref<8x512xf32, #tpu.memory_space<vmem>>) attributes {dimension_semantics = [#tpu.dimension_semantics<arbitrary>], iteration_bounds = array<i64: 1>, scalar_prefetch = 0 : i64, scratch_operands = 0 : i64, tpu.core_type = #tpu.core_type<tc>, window_params = [{pipeline_mode = #tpu.pipeline_mode<synchronous>, transform_indices = @transform_0, window_bounds = array<i64: 8, 1>}, {pipeline_mode = #tpu.pipeline_mode<synchronous>, transform_indices = @transform_1, window_bounds = array<i64: 64, 32>}, {pipeline_mode = #tpu.pipeline_mode<synchronous>, transform_indices = @transform_2, window_bounds = array<i64: 2, 8, 32>}, {pipeline_mode = #tpu.pipeline_mode<synchronous>, transform_indices = @transform_3, window_bounds = array<i64: 8, 16, 32>}, {pipeline_mode = #tpu.pipeline_mode<synchronous>, transform_indices = @transform_4, window_bounds = array<i64: 32, 16>}, {pipeline_mode = #tpu.pipeline_mode<synchronous>, transform_indices = @transform_5, window_bounds = array<i64: 32, 16>}, {pipeline_mode = #tpu.pipeline_mode<synchronous>, transform_indices = @transform_6, window_bounds = array<i64: 1, 16>}, {pipeline_mode = #tpu.pipeline_mode<synchronous>, transform_indices = @transform_7, window_bounds = array<i64: 32, 32>}, {pipeline_mode = #tpu.pipeline_mode<synchronous>, transform_indices = @transform_8, window_bounds = array<i64: 32, 32>}, {pipeline_mode = #tpu.pipeline_mode<synchronous>, transform_indices = @transform_9, window_bounds = array<i64: 1, 32>}, {pipeline_mode = #tpu.pipeline_mode<synchronous>, transform_indices = @transform_10, window_bounds = array<i64: 2, 32, 384>}, {pipeline_mode = #tpu.pipeline_mode<synchronous>, transform_indices = @transform_11, window_bounds = array<i64: 2, 32, 384>}, {pipeline_mode = #tpu.pipeline_mode<synchronous>, transform_indices = @transform_12, window_bounds = array<i64: 2, 1, 384>}, {pipeline_mode = #tpu.pipeline_mode<synchronous>, transform_indices = @transform_13, window_bounds = array<i64: 2, 1, 384>}, {pipeline_mode = #tpu.pipeline_mode<synchronous>, transform_indices = @transform_14, window_bounds = array<i64: 32, 64>}, {pipeline_mode = #tpu.pipeline_mode<synchronous>, transform_indices = @transform_15, window_bounds = array<i64: 1, 64>}, {pipeline_mode = #tpu.pipeline_mode<synchronous>, transform_indices = @transform_16, window_bounds = array<i64: 8, 512>}]} {
    %cst = arith.constant 0.000000e+00 : f32
    %0 = vector.broadcast %cst : f32 to vector<8x512xf32>
    %c0 = arith.constant 0 : index
    %c0_0 = arith.constant 0 : index
    %1 = vector.load %arg17[%c0, %c0_0] : memref<8x512xf32, #tpu.memory_space<vmem>>, vector<8x512xf32>
    tpu.vector_store %arg17[%c0, %c0_0], %0 {strides = array<i32>} : memref<8x512xf32, #tpu.memory_space<vmem>>, vector<8x512xf32>,
    %c0_1 = arith.constant 0 : index
    %c0_2 = arith.constant 0 : index
    %2 = vector.load %arg1[%c0_1, %c0_2] : memref<8x1xi32, #tpu.memory_space<vmem>>, vector<8x1xi32>
    %3 = tpu.iota {dimensions = array<i32: 1>} : vector<8x64xi32>
    %4 = vector.broadcast %2 : vector<8x1xi32> to vector<8x64xi32>
    %5 = arith.cmpi eq, %3, %4 : vector<8x64xi32>
    %6 = arith.extui %5 : vector<8x64xi1> to vector<8x64xi32>
    %7 = arith.sitofp %6 : vector<8x64xi32> to vector<8x64xf32>
    %c0_3 = arith.constant 0 : index
    %c0_4 = arith.constant 0 : index
    %8 = vector.load %arg2[%c0_3, %c0_4] : memref<64x32xf32, #tpu.memory_space<vmem>>, vector<64x32xf32>
    %cst_5 = arith.constant dense<0.000000e+00> : vector<8x32xf32>
    %9 = tpu.matmul %7, %8, %cst_5 {dimension_numbers = #tpu.dot_dimension_numbers<[1], [0], [0], [1], [0, 0, 1, 1], [], []>} : vector<8x64xf32>, vector<64x32xf32>, vector<8x32xf32> -> vector<8x32xf32>
    %c0_6 = arith.constant 0 : index
    %c0_7 = arith.constant 0 : index
    %c0_8 = arith.constant 0 : index
    %10 = vector.load %arg3[%c0_6, %c0_7, %c0_8] : memref<2x8x32xf32, #tpu.memory_space<vmem>>, vector<1x8x32xf32>
    %11 = vector.shape_cast %10 : vector<1x8x32xf32> to vector<8x32xf32>
    %c0_9 = arith.constant 0 : index
    %c0_10 = arith.constant 0 : index
    %12 = vector.load %arg5[%c0_9, %c0_10] : memref<32x16xf32, #tpu.memory_space<vmem>>, vector<32x16xf32>
    %cst_11 = arith.constant dense<0.000000e+00> : vector<8x16xf32>
    %13 = tpu.matmul %9, %12, %cst_11 {dimension_numbers = #tpu.dot_dimension_numbers<[1], [0], [0], [1], [0, 0, 1, 1], [], []>} : vector<8x32xf32>, vector<32x16xf32>, vector<8x16xf32> -> vector<8x16xf32>
    %c0_12 = arith.constant 0 : index
    %c0_13 = arith.constant 0 : index
    %14 = vector.load %arg6[%c0_12, %c0_13] : memref<32x16xf32, #tpu.memory_space<vmem>>, vector<32x16xf32>
    %cst_14 = arith.constant dense<0.000000e+00> : vector<8x16xf32>
    %15 = tpu.matmul %11, %14, %cst_14 {dimension_numbers = #tpu.dot_dimension_numbers<[1], [0], [0], [1], [0, 0, 1, 1], [], []>} : vector<8x32xf32>, vector<32x16xf32>, vector<8x16xf32> -> vector<8x16xf32>
    %16 = arith.addf %13, %15 : vector<8x16xf32>
    %c0_15 = arith.constant 0 : index
    %c0_16 = arith.constant 0 : index
    %17 = vector.load %arg7[%c0_15, %c0_16] : memref<1x16xf32, #tpu.memory_space<vmem>>, vector<1x16xf32>
    %18 = vector.broadcast %17 : vector<1x16xf32> to vector<8x16xf32>
    %19 = arith.addf %16, %18 : vector<8x16xf32>
    %cst_17 = arith.constant dense<0xFF800000> : vector<8xf32>
    %20 = vector.multi_reduction <maximumf>, %19, %cst_17 [1] : vector<8x16xf32> to vector<8xf32>
    %21 = vector.shape_cast %20 : vector<8xf32> to vector<8x1xf32>
    %22 = vector.broadcast %21 : vector<8x1xf32> to vector<8x16xf32>
    %23 = arith.subf %19, %22 : vector<8x16xf32>
    %24 = math.exp %23 : vector<8x16xf32>
    %cst_18 = arith.constant dense<0.000000e+00> : vector<8xf32>
    %25 = vector.multi_reduction <add>, %24, %cst_18 [1] : vector<8x16xf32> to vector<8xf32>
    %26 = vector.shape_cast %25 : vector<8xf32> to vector<8x1xf32>
    %27 = tpu.reciprocal %26 {approx = true} : vector<8x1xf32> -> vector<8x1xf32>
    %28 = vector.broadcast %27 : vector<8x1xf32> to vector<8x16xf32>
    %29 = arith.mulf %24, %28 : vector<8x16xf32>
    %30 = vector.shape_cast %29 : vector<8x16xf32> to vector<8x16x1xf32>
    %c0_19 = arith.constant 0 : index
    %c0_20 = arith.constant 0 : index
    %c0_21 = arith.constant 0 : index
    %31 = vector.load %arg4[%c0_19, %c0_20, %c0_21] : memref<8x16x32xf32, #tpu.memory_space<vmem>>, vector<8x16x32xf32>
    %32 = vector.broadcast %30 : vector<8x16x1xf32> to vector<8x16x32xf32>
    %33 = arith.mulf %32, %31 : vector<8x16x32xf32>
    %cst_22 = arith.constant dense<0.000000e+00> : vector<8x32xf32>
    %34 = vector.multi_reduction <add>, %33, %cst_22 [1] : vector<8x16x32xf32> to vector<8x32xf32>
    %c0_23 = arith.constant 0 : index
    %c0_24 = arith.constant 0 : index
    %35 = vector.load %arg8[%c0_23, %c0_24] : memref<32x32xf32, #tpu.memory_space<vmem>>, vector<32x32xf32>
    %cst_25 = arith.constant dense<0.000000e+00> : vector<8x32xf32>
    %36 = tpu.matmul %9, %35, %cst_25 {dimension_numbers = #tpu.dot_dimension_numbers<[1], [0], [0], [1], [0, 0, 1, 1], [], []>} : vector<8x32xf32>, vector<32x32xf32>, vector<8x32xf32> -> vector<8x32xf32>
    %c0_26 = arith.constant 0 : index
    %c0_27 = arith.constant 0 : index
    %37 = vector.load %arg9[%c0_26, %c0_27] : memref<32x32xf32, #tpu.memory_space<vmem>>, vector<32x32xf32>
    %cst_28 = arith.constant dense<0.000000e+00> : vector<8x32xf32>
    %38 = tpu.matmul %34, %37, %cst_28 {dimension_numbers = #tpu.dot_dimension_numbers<[1], [0], [0], [1], [0, 0, 1, 1], [], []>} : vector<8x32xf32>, vector<32x32xf32>, vector<8x32xf32> -> vector<8x32xf32>
    %39 = arith.addf %36, %38 : vector<8x32xf32>
    %c0_29 = arith.constant 0 : index
    %c0_30 = arith.constant 0 : index
    %40 = vector.load %arg10[%c0_29, %c0_30] : memref<1x32xf32, #tpu.memory_space<vmem>>, vector<1x32xf32>
    %41 = vector.broadcast %40 : vector<1x32xf32> to vector<8x32xf32>
    %42 = arith.addf %39, %41 : vector<8x32xf32>
    %cst_31 = arith.constant 0.000000e+00 : f32
    %43 = vector.broadcast %cst_31 : f32 to vector<8x32xf32>
    %44 = arith.maximumf %42, %43 : vector<8x32xf32>
    %c0_32 = arith.constant 0 : index
    %c0_33 = arith.constant 0 : index
    %c0_34 = arith.constant 0 : index
    %45 = vector.load %arg3[%c0_32, %c0_33, %c0_34] : memref<2x8x32xf32, #tpu.memory_space<vmem>>, vector<1x8x32xf32>
    %46 = vector.shape_cast %45 : vector<1x8x32xf32> to vector<8x32xf32>
    %c0_35 = arith.constant 0 : index
    %c0_36 = arith.constant 0 : index
    %c0_37 = arith.constant 0 : index
    %47 = vector.load %arg11[%c0_35, %c0_36, %c0_37] : memref<2x32x384xf32, #tpu.memory_space<vmem>>, vector<1x32x384xf32>
    %48 = vector.shape_cast %47 : vector<1x32x384xf32> to vector<32x384xf32>
    %cst_38 = arith.constant dense<0.000000e+00> : vector<8x384xf32>
    %49 = tpu.matmul %44, %48, %cst_38 {dimension_numbers = #tpu.dot_dimension_numbers<[1], [0], [0], [1], [0, 0, 1, 1], [], []>} : vector<8x32xf32>, vector<32x384xf32>, vector<8x384xf32> -> vector<8x384xf32>
    %c0_39 = arith.constant 0 : index
    %c0_40 = arith.constant 0 : index
    %c0_41 = arith.constant 0 : index
    %50 = vector.load %arg13[%c0_39, %c0_40, %c0_41] : memref<2x1x384xf32, #tpu.memory_space<vmem>>, vector<1x1x384xf32>
    %51 = vector.shape_cast %50 : vector<1x1x384xf32> to vector<1x384xf32>
    %52 = vector.broadcast %51 : vector<1x384xf32> to vector<8x384xf32>
    %53 = arith.addf %49, %52 : vector<8x384xf32>
    %c0_42 = arith.constant 0 : index
    %c0_43 = arith.constant 0 : index
    %c0_44 = arith.constant 0 : index
    %54 = vector.load %arg12[%c0_42, %c0_43, %c0_44] : memref<2x32x384xf32, #tpu.memory_space<vmem>>, vector<1x32x384xf32>
    %55 = vector.shape_cast %54 : vector<1x32x384xf32> to vector<32x384xf32>
    %cst_45 = arith.constant dense<0.000000e+00> : vector<8x384xf32>
    %56 = tpu.matmul %46, %55, %cst_45 {dimension_numbers = #tpu.dot_dimension_numbers<[1], [0], [0], [1], [0, 0, 1, 1], [], []>} : vector<8x32xf32>, vector<32x384xf32>, vector<8x384xf32> -> vector<8x384xf32>
    %c0_46 = arith.constant 0 : index
    %c0_47 = arith.constant 0 : index
    %c0_48 = arith.constant 0 : index
    %57 = vector.load %arg14[%c0_46, %c0_47, %c0_48] : memref<2x1x384xf32, #tpu.memory_space<vmem>>, vector<1x1x384xf32>
    %58 = vector.shape_cast %57 : vector<1x1x384xf32> to vector<1x384xf32>
    %59 = vector.broadcast %58 : vector<1x384xf32> to vector<8x384xf32>
    %60 = arith.addf %56, %59 : vector<8x384xf32>
    %61 = vector.extract_strided_slice %53 {offsets = [0, 0], sizes = [8, 32], strides = [1, 1]} : vector<8x384xf32> to vector<8x32xf32>
    %62 = vector.extract_strided_slice %60 {offsets = [0, 0], sizes = [8, 32], strides = [1, 1]} : vector<8x384xf32> to vector<8x32xf32>
    %63 = vector.extract_strided_slice %53 {offsets = [0, 128], sizes = [8, 32], strides = [1, 1]} : vector<8x384xf32> to vector<8x32xf32>
    %64 = vector.extract_strided_slice %60 {offsets = [0, 128], sizes = [8, 32], strides = [1, 1]} : vector<8x384xf32> to vector<8x32xf32>
    %65 = vector.extract_strided_slice %53 {offsets = [0, 256], sizes = [8, 32], strides = [1, 1]} : vector<8x384xf32> to vector<8x32xf32>
    %66 = vector.extract_strided_slice %60 {offsets = [0, 256], sizes = [8, 32], strides = [1, 1]} : vector<8x384xf32> to vector<8x32xf32>
    %67 = arith.addf %61, %62 : vector<8x32xf32>
    %68 = arith.negf %67 : vector<8x32xf32>
    %69 = math.exp %68 : vector<8x32xf32>
    %cst_49 = arith.constant 1.000000e+00 : f32
    %70 = vector.broadcast %cst_49 : f32 to vector<8x32xf32>
    %71 = arith.addf %70, %69 : vector<8x32xf32>
    %72 = arith.divf %70, %71 : vector<8x32xf32>
    %73 = arith.addf %63, %64 : vector<8x32xf32>
    %74 = arith.negf %73 : vector<8x32xf32>
    %75 = math.exp %74 : vector<8x32xf32>
    %cst_50 = arith.constant 1.000000e+00 : f32
    %76 = vector.broadcast %cst_50 : f32 to vector<8x32xf32>
    %77 = arith.addf %76, %75 : vector<8x32xf32>
    %78 = arith.divf %76, %77 : vector<8x32xf32>
    %79 = arith.mulf %72, %66 : vector<8x32xf32>
    %80 = arith.addf %65, %79 : vector<8x32xf32>
    %81 = math.tanh %80 : vector<8x32xf32>
    %cst_51 = arith.constant 1.000000e+00 : f32
    %82 = vector.broadcast %cst_51 : f32 to vector<8x32xf32>
    %83 = arith.subf %82, %78 : vector<8x32xf32>
    %84 = arith.mulf %83, %81 : vector<8x32xf32>
    %85 = arith.mulf %78, %46 : vector<8x32xf32>
    %86 = arith.addf %84, %85 : vector<8x32xf32>
    %c0_52 = arith.constant 0 : index
    %c128 = arith.constant 128 : index
    %87 = vector.load %arg17[%c0_52, %c128] : memref<8x512xf32, #tpu.memory_space<vmem>>, vector<8x32xf32>
    tpu.vector_store %arg17[%c0_52, %c128], %86 {strides = array<i32>} : memref<8x512xf32, #tpu.memory_space<vmem>>, vector<8x32xf32>,
    %c1 = arith.constant 1 : index
    %c0_53 = arith.constant 0 : index
    %c0_54 = arith.constant 0 : index
    %88 = vector.load %arg3[%c1, %c0_53, %c0_54] : memref<2x8x32xf32, #tpu.memory_space<vmem>>, vector<1x8x32xf32>
    %89 = vector.shape_cast %88 : vector<1x8x32xf32> to vector<8x32xf32>
    %c1_55 = arith.constant 1 : index
    %c0_56 = arith.constant 0 : index
    %c0_57 = arith.constant 0 : index
    %90 = vector.load %arg11[%c1_55, %c0_56, %c0_57] : memref<2x32x384xf32, #tpu.memory_space<vmem>>, vector<1x32x384xf32>
    %91 = vector.shape_cast %90 : vector<1x32x384xf32> to vector<32x384xf32>
    %cst_58 = arith.constant dense<0.000000e+00> : vector<8x384xf32>
    %92 = tpu.matmul %86, %91, %cst_58 {dimension_numbers = #tpu.dot_dimension_numbers<[1], [0], [0], [1], [0, 0, 1, 1], [], []>} : vector<8x32xf32>, vector<32x384xf32>, vector<8x384xf32> -> vector<8x384xf32>
    %c1_59 = arith.constant 1 : index
    %c0_60 = arith.constant 0 : index
    %c0_61 = arith.constant 0 : index
    %93 = vector.load %arg13[%c1_59, %c0_60, %c0_61] : memref<2x1x384xf32, #tpu.memory_space<vmem>>, vector<1x1x384xf32>
    %94 = vector.shape_cast %93 : vector<1x1x384xf32> to vector<1x384xf32>
    %95 = vector.broadcast %94 : vector<1x384xf32> to vector<8x384xf32>
    %96 = arith.addf %92, %95 : vector<8x384xf32>
    %c1_62 = arith.constant 1 : index
    %c0_63 = arith.constant 0 : index
    %c0_64 = arith.constant 0 : index
    %97 = vector.load %arg12[%c1_62, %c0_63, %c0_64] : memref<2x32x384xf32, #tpu.memory_space<vmem>>, vector<1x32x384xf32>
    %98 = vector.shape_cast %97 : vector<1x32x384xf32> to vector<32x384xf32>
    %cst_65 = arith.constant dense<0.000000e+00> : vector<8x384xf32>
    %99 = tpu.matmul %89, %98, %cst_65 {dimension_numbers = #tpu.dot_dimension_numbers<[1], [0], [0], [1], [0, 0, 1, 1], [], []>} : vector<8x32xf32>, vector<32x384xf32>, vector<8x384xf32> -> vector<8x384xf32>
    %c1_66 = arith.constant 1 : index
    %c0_67 = arith.constant 0 : index
    %c0_68 = arith.constant 0 : index
    %100 = vector.load %arg14[%c1_66, %c0_67, %c0_68] : memref<2x1x384xf32, #tpu.memory_space<vmem>>, vector<1x1x384xf32>
    %101 = vector.shape_cast %100 : vector<1x1x384xf32> to vector<1x384xf32>
    %102 = vector.broadcast %101 : vector<1x384xf32> to vector<8x384xf32>
    %103 = arith.addf %99, %102 : vector<8x384xf32>
    %104 = vector.extract_strided_slice %96 {offsets = [0, 0], sizes = [8, 32], strides = [1, 1]} : vector<8x384xf32> to vector<8x32xf32>
    %105 = vector.extract_strided_slice %103 {offsets = [0, 0], sizes = [8, 32], strides = [1, 1]} : vector<8x384xf32> to vector<8x32xf32>
    %106 = vector.extract_strided_slice %96 {offsets = [0, 128], sizes = [8, 32], strides = [1, 1]} : vector<8x384xf32> to vector<8x32xf32>
    %107 = vector.extract_strided_slice %103 {offsets = [0, 128], sizes = [8, 32], strides = [1, 1]} : vector<8x384xf32> to vector<8x32xf32>
    %108 = vector.extract_strided_slice %96 {offsets = [0, 256], sizes = [8, 32], strides = [1, 1]} : vector<8x384xf32> to vector<8x32xf32>
    %109 = vector.extract_strided_slice %103 {offsets = [0, 256], sizes = [8, 32], strides = [1, 1]} : vector<8x384xf32> to vector<8x32xf32>
    %110 = arith.addf %104, %105 : vector<8x32xf32>
    %111 = arith.negf %110 : vector<8x32xf32>
    %112 = math.exp %111 : vector<8x32xf32>
    %cst_69 = arith.constant 1.000000e+00 : f32
    %113 = vector.broadcast %cst_69 : f32 to vector<8x32xf32>
    %114 = arith.addf %113, %112 : vector<8x32xf32>
    %115 = arith.divf %113, %114 : vector<8x32xf32>
    %116 = arith.addf %106, %107 : vector<8x32xf32>
    %117 = arith.negf %116 : vector<8x32xf32>
    %118 = math.exp %117 : vector<8x32xf32>
    %cst_70 = arith.constant 1.000000e+00 : f32
    %119 = vector.broadcast %cst_70 : f32 to vector<8x32xf32>
    %120 = arith.addf %119, %118 : vector<8x32xf32>
    %121 = arith.divf %119, %120 : vector<8x32xf32>
    %122 = arith.mulf %115, %109 : vector<8x32xf32>
    %123 = arith.addf %108, %122 : vector<8x32xf32>
    %124 = math.tanh %123 : vector<8x32xf32>
    %cst_71 = arith.constant 1.000000e+00 : f32
    %125 = vector.broadcast %cst_71 : f32 to vector<8x32xf32>
    %126 = arith.subf %125, %121 : vector<8x32xf32>
    %127 = arith.mulf %126, %124 : vector<8x32xf32>
    %128 = arith.mulf %121, %89 : vector<8x32xf32>
    %129 = arith.addf %127, %128 : vector<8x32xf32>
    %c0_72 = arith.constant 0 : index
    %c256 = arith.constant 256 : index
    %130 = vector.load %arg17[%c0_72, %c256] : memref<8x512xf32, #tpu.memory_space<vmem>>, vector<8x32xf32>
    tpu.vector_store %arg17[%c0_72, %c256], %129 {strides = array<i32>} : memref<8x512xf32, #tpu.memory_space<vmem>>, vector<8x32xf32>,
    %c0_73 = arith.constant 0 : index
    %c0_74 = arith.constant 0 : index
    %131 = vector.load %arg15[%c0_73, %c0_74] : memref<32x64xf32, #tpu.memory_space<vmem>>, vector<32x64xf32>
    %cst_75 = arith.constant dense<0.000000e+00> : vector<8x64xf32>
    %132 = tpu.matmul %129, %131, %cst_75 {dimension_numbers = #tpu.dot_dimension_numbers<[1], [0], [0], [1], [0, 0, 1, 1], [], []>} : vector<8x32xf32>, vector<32x64xf32>, vector<8x64xf32> -> vector<8x64xf32>
    %c0_76 = arith.constant 0 : index
    %c0_77 = arith.constant 0 : index
    %133 = vector.load %arg16[%c0_76, %c0_77] : memref<1x64xf32, #tpu.memory_space<vmem>>, vector<1x64xf32>
    %134 = vector.broadcast %133 : vector<1x64xf32> to vector<8x64xf32>
    %135 = arith.addf %132, %134 : vector<8x64xf32>
    %cst_78 = arith.constant dense<0xFF800000> : vector<8xf32>
    %136 = vector.multi_reduction <maximumf>, %135, %cst_78 [1] : vector<8x64xf32> to vector<8xf32>
    %137 = vector.shape_cast %136 : vector<8xf32> to vector<8x1xf32>
    %138 = vector.broadcast %137 : vector<8x1xf32> to vector<8x64xf32>
    %139 = arith.subf %135, %138 : vector<8x64xf32>
    %140 = math.exp %139 : vector<8x64xf32>
    %cst_79 = arith.constant dense<0.000000e+00> : vector<8xf32>
    %141 = vector.multi_reduction <add>, %140, %cst_79 [1] : vector<8x64xf32> to vector<8xf32>
    %142 = vector.shape_cast %141 : vector<8xf32> to vector<8x1xf32>
    %143 = math.log %142 : vector<8x1xf32>
    %144 = arith.addf %143, %137 : vector<8x1xf32>
    %145 = vector.broadcast %144 : vector<8x1xf32> to vector<8x64xf32>
    %146 = arith.subf %135, %145 : vector<8x64xf32>
    %c0_80 = arith.constant 0 : index
    %c0_81 = arith.constant 0 : index
    %147 = vector.load %arg17[%c0_80, %c0_81] : memref<8x512xf32, #tpu.memory_space<vmem>>, vector<8x64xf32>
    tpu.vector_store %arg17[%c0_80, %c0_81], %146 {strides = array<i32>} : memref<8x512xf32, #tpu.memory_space<vmem>>, vector<8x64xf32>,
    %c0_82 = arith.constant 0 : index
    %c384 = arith.constant 384 : index
    %148 = vector.load %arg17[%c0_82, %c384] : memref<8x512xf32, #tpu.memory_space<vmem>>, vector<8x16xf32>
    tpu.vector_store %arg17[%c0_82, %c384], %29 {strides = array<i32>} : memref<8x512xf32, #tpu.memory_space<vmem>>, vector<8x16xf32>,
    return
  }
  func.func @transform_0(%arg0: i32) -> (i32, i32) {
    %c0_i32 = arith.constant 0 : i32
    %c0_i32_0 = arith.constant 0 : i32
    %c0_i32_1 = arith.constant 0 : i32
    return %c0_i32, %c0_i32_0 : i32, i32
  }
  func.func @transform_1(%arg0: i32) -> (i32, i32) {
    %c0_i32 = arith.constant 0 : i32
    %c0_i32_0 = arith.constant 0 : i32
    %c0_i32_1 = arith.constant 0 : i32
    return %c0_i32, %c0_i32_0 : i32, i32
  }
  func.func @transform_2(%arg0: i32) -> (i32, i32, i32) {
    %c0_i32 = arith.constant 0 : i32
    %c0_i32_0 = arith.constant 0 : i32
    %c0_i32_1 = arith.constant 0 : i32
    %c0_i32_2 = arith.constant 0 : i32
    return %c0_i32, %c0_i32_0, %c0_i32_1 : i32, i32, i32
  }
  func.func @transform_3(%arg0: i32) -> (i32, i32, i32) {
    %c0_i32 = arith.constant 0 : i32
    %c0_i32_0 = arith.constant 0 : i32
    %c0_i32_1 = arith.constant 0 : i32
    %c0_i32_2 = arith.constant 0 : i32
    return %c0_i32, %c0_i32_0, %c0_i32_1 : i32, i32, i32
  }
  func.func @transform_4(%arg0: i32) -> (i32, i32) {
    %c0_i32 = arith.constant 0 : i32
    %c0_i32_0 = arith.constant 0 : i32
    %c0_i32_1 = arith.constant 0 : i32
    return %c0_i32, %c0_i32_0 : i32, i32
  }
  func.func @transform_5(%arg0: i32) -> (i32, i32) {
    %c0_i32 = arith.constant 0 : i32
    %c0_i32_0 = arith.constant 0 : i32
    %c0_i32_1 = arith.constant 0 : i32
    return %c0_i32, %c0_i32_0 : i32, i32
  }
  func.func @transform_6(%arg0: i32) -> (i32, i32) {
    %c0_i32 = arith.constant 0 : i32
    %c0_i32_0 = arith.constant 0 : i32
    %c0_i32_1 = arith.constant 0 : i32
    return %c0_i32, %c0_i32_0 : i32, i32
  }
  func.func @transform_7(%arg0: i32) -> (i32, i32) {
    %c0_i32 = arith.constant 0 : i32
    %c0_i32_0 = arith.constant 0 : i32
    %c0_i32_1 = arith.constant 0 : i32
    return %c0_i32, %c0_i32_0 : i32, i32
  }
  func.func @transform_8(%arg0: i32) -> (i32, i32) {
    %c0_i32 = arith.constant 0 : i32
    %c0_i32_0 = arith.constant 0 : i32
    %c0_i32_1 = arith.constant 0 : i32
    return %c0_i32, %c0_i32_0 : i32, i32
  }
  func.func @transform_9(%arg0: i32) -> (i32, i32) {
    %c0_i32 = arith.constant 0 : i32
    %c0_i32_0 = arith.constant 0 : i32
    %c0_i32_1 = arith.constant 0 : i32
    return %c0_i32, %c0_i32_0 : i32, i32
  }
  func.func @transform_10(%arg0: i32) -> (i32, i32, i32) {
    %c0_i32 = arith.constant 0 : i32
    %c0_i32_0 = arith.constant 0 : i32
    %c0_i32_1 = arith.constant 0 : i32
    %c0_i32_2 = arith.constant 0 : i32
    return %c0_i32, %c0_i32_0, %c0_i32_1 : i32, i32, i32
  }
  func.func @transform_11(%arg0: i32) -> (i32, i32, i32) {
    %c0_i32 = arith.constant 0 : i32
    %c0_i32_0 = arith.constant 0 : i32
    %c0_i32_1 = arith.constant 0 : i32
    %c0_i32_2 = arith.constant 0 : i32
    return %c0_i32, %c0_i32_0, %c0_i32_1 : i32, i32, i32
  }
  func.func @transform_12(%arg0: i32) -> (i32, i32, i32) {
    %c0_i32 = arith.constant 0 : i32
    %c0_i32_0 = arith.constant 0 : i32
    %c0_i32_1 = arith.constant 0 : i32
    %c0_i32_2 = arith.constant 0 : i32
    return %c0_i32, %c0_i32_0, %c0_i32_1 : i32, i32, i32
  }
  func.func @transform_13(%arg0: i32) -> (i32, i32, i32) {
    %c0_i32 = arith.constant 0 : i32
    %c0_i32_0 = arith.constant 0 : i32
    %c0_i32_1 = arith.constant 0 : i32
    %c0_i32_2 = arith.constant 0 : i32
    return %c0_i32, %c0_i32_0, %c0_i32_1 : i32, i32, i32
  }
  func.func @transform_14(%arg0: i32) -> (i32, i32) {
    %c0_i32 = arith.constant 0 : i32
    %c0_i32_0 = arith.constant 0 : i32
    %c0_i32_1 = arith.constant 0 : i32
    return %c0_i32, %c0_i32_0 : i32, i32
  }
  func.func @transform_15(%arg0: i32) -> (i32, i32) {
    %c0_i32 = arith.constant 0 : i32
    %c0_i32_0 = arith.constant 0 : i32
    %c0_i32_1 = arith.constant 0 : i32
    return %c0_i32, %c0_i32_0 : i32, i32
  }
  func.func @transform_16(%arg0: i32) -> (i32, i32) {
    %c0_i32 = arith.constant 0 : i32
    %c0_i32_0 = arith.constant 0 : i32
    %c0_i32_1 = arith.constant 0 : i32
    return %c0_i32, %c0_i32_0 : i32, i32
  }
}

</mosaic_0001>

<llo_original>
// kernel: attn_decoder_forward.1
$region0: #{attn_decoder_forward.1}
  #allocation0 [shape = 'u32[]', space=smem, size = 0x4, offset = 0x4, fixed_abs, tag = 'smem constant byte address 0x4 - core index']
  #allocation1 [shape = 'u32[72,128]{1,0:T(1,128)}', space=vmem, size = 0x9000, scoped, tag = 'internal scratch']
  %s0 = inlined_call_operand.vmem [shape: s32[8,1], index: 0, kind: input, shape index: {}]
  %s1 = inlined_call_operand.vmem [shape: f32[64,32], index: 1, kind: input, shape index: {}]
  %s2 = inlined_call_operand.vmem [shape: f32[2,8,32], index: 2, kind: input, shape index: {}]
  %s3 = inlined_call_operand.vmem [shape: f32[8,16,32], index: 3, kind: input, shape index: {}]
  %s4 = inlined_call_operand.vmem [shape: f32[32,16], index: 4, kind: input, shape index: {}]
  %s5 = inlined_call_operand.vmem [shape: f32[32,16], index: 5, kind: input, shape index: {}]
  %s6 = inlined_call_operand.vmem [shape: f32[1,16], index: 6, kind: input, shape index: {}]
  %s7 = inlined_call_operand.vmem [shape: f32[32,32], index: 7, kind: input, shape index: {}]
  %s8 = inlined_call_operand.vmem [shape: f32[32,32], index: 8, kind: input, shape index: {}]
  %s9 = inlined_call_operand.vmem [shape: f32[1,32], index: 9, kind: input, shape index: {}]
  %s10 = inlined_call_operand.vmem [shape: f32[2,32,384], index: 10, kind: input, shape index: {}]
  %s11 = inlined_call_operand.hbm [shape: f32[2,32,384], index: 11, kind: input, shape index: {}]
  %s12 = inlined_call_operand.hbm [shape: f32[2,1,384], index: 12, kind: input, shape index: {}]
  %s13 = inlined_call_operand.hbm [shape: f32[2,1,384], index: 13, kind: input, shape index: {}]
  %s14 = inlined_call_operand.hbm [shape: f32[32,64], index: 14, kind: input, shape index: {}]
  %s15 = inlined_call_operand.hbm [shape: f32[1,64], index: 15, kind: input, shape index: {}]
  %s16 = inlined_call_operand.vmem [shape: f32[8,512], index: 16, kind: output, shape index: {}]
  %s17 = sld [smem:[#allocation0]]
  $region94: #{attn_decoder_forward.1} parent=0
    _
  %s19 = ssub.s32 1, %s17
  %s20 = scalar_select 0, %s19, %s17
  $region1: #{attn_decoder_forward.1} parent=0
    #allocation2 [shape = 'u8[98304]{0}', space=vmem, size = 0x18000, scoped, tag = 'input window, operand 11, single buffered']
    #allocation3 [shape = 's32[1]{0}', space=sflag, size = 0x4, scoped, tag = 'scoped memory for attn_decoder_forward.1']
    #allocation4 [shape = 'u8[3072]{0}', space=vmem, size = 0xc00, scoped, tag = 'input window, operand 12, single buffered']
    #allocation5 [shape = 's32[1]{0}', space=sflag, size = 0x4, scoped, tag = 'scoped memory for attn_decoder_forward.1']
    #allocation6 [shape = 'u8[3072]{0}', space=vmem, size = 0xc00, scoped, tag = 'input window, operand 13, single buffered']
    #allocation7 [shape = 'u8[16384]{0}', space=vmem, size = 0x4000, scoped, tag = 'input window, operand 14, single buffered']
    #allocation8 [shape = 's32[1]{0}', space=sflag, size = 0x4, scoped, tag = 'scoped memory for attn_decoder_forward.1']
    #allocation9 [shape = 'u8[512]{0}', space=vmem, size = 0x400, scoped, tag = 'input window, operand 15, single buffered']
    %21 = vsyncpa [#allocation3], 0
    %22 = vsyncpa [#allocation5], 0
    %23 = vsyncpa [#allocation8], 0
    // Predicated region
    $region2: #{attn_decoder_forward.1} parent=1 // pred_check
      _
    $region3: #{attn_decoder_forward.1} parent=1 // pred_check_branch
      %25 = sbr.rel (0) target = $region5
    $region4: #{attn_decoder_forward.1} parent=1 // pred_region
      _
    $region5: #{attn_decoder_forward.1} parent=1 // pred_fallthru
      _
    // Predicated region
    $region6: #{attn_decoder_forward.1} parent=1 // pred_check
      _
    $region7: #{attn_decoder_forward.1} parent=1 // pred_check_branch
      %27 = sbr.rel (0) target = $region9
    $region8: #{attn_decoder_forward.1} parent=1 // pred_region
      _
    $region9: #{attn_decoder_forward.1} parent=1 // pred_fallthru
      _
    // Predicated region
    $region10: #{attn_decoder_forward.1} parent=1 // pred_check
      _
    $region11: #{attn_decoder_forward.1} parent=1 // pred_check_branch
      %29 = sbr.rel (0) target = $region13
    $region12: #{attn_decoder_forward.1} parent=1 // pred_region
      _
    $region13: #{attn_decoder_forward.1} parent=1 // pred_fallthru
      _
    // Predicated region
    $region14: #{attn_decoder_forward.1} parent=1 // pred_check
      _
    $region15: #{attn_decoder_forward.1} parent=1 // pred_check_branch
      %31 = sbr.rel (0) target = $region17
    $region16: #{attn_decoder_forward.1} parent=1 // pred_region
      _
    $region17: #{attn_decoder_forward.1} parent=1 // pred_fallthru
      _
    // Predicated region
    $region18: #{attn_decoder_forward.1} parent=1 // pred_check
      _
    $region19: #{attn_decoder_forward.1} parent=1 // pred_check_branch
      %33 = sbr.rel (0) target = $region21
    $region20: #{attn_decoder_forward.1} parent=1 // pred_region
      _
    $region21: #{attn_decoder_forward.1} parent=1 // pred_fallthru
      _
    // Predicated region
    $region22: #{attn_decoder_forward.1} parent=1 // pred_check
      _
    $region23: #{attn_decoder_forward.1} parent=1 // pred_check_branch
      %35 = sbr.rel (0) target = $region25
    $region24: #{attn_decoder_forward.1} parent=1 // pred_region
      _
    $region25: #{attn_decoder_forward.1} parent=1 // pred_fallthru
      _
    // Predicated region
    $region26: #{attn_decoder_forward.1} parent=1 // pred_check
      _
    $region27: #{attn_decoder_forward.1} parent=1 // pred_check_branch
      %37 = sbr.rel (0) target = $region29
    $region28: #{attn_decoder_forward.1} parent=1 // pred_region
      _
    $region29: #{attn_decoder_forward.1} parent=1 // pred_fallthru
      _
    // Predicated region
    $region30: #{attn_decoder_forward.1} parent=1 // pred_check
      _
    $region31: #{attn_decoder_forward.1} parent=1 // pred_check_branch
      %39 = sbr.rel (0) target = $region33
    $region32: #{attn_decoder_forward.1} parent=1 // pred_region
      _
    $region33: #{attn_decoder_forward.1} parent=1 // pred_fallthru
      _
    // Predicated region
    $region34: #{attn_decoder_forward.1} parent=1 // pred_check
      _
    $region35: #{attn_decoder_forward.1} parent=1 // pred_check_branch
      %41 = sbr.rel (0) target = $region37
    $region36: #{attn_decoder_forward.1} parent=1 // pred_region
      _
    $region37: #{attn_decoder_forward.1} parent=1 // pred_fallthru
      _
    // Predicated region
    $region38: #{attn_decoder_forward.1} parent=1 // pred_check
      _
    $region39: #{attn_decoder_forward.1} parent=1 // pred_check_branch
      %43 = sbr.rel (0) target = $region41
    $region40: #{attn_decoder_forward.1} parent=1 // pred_region
      _
    $region41: #{attn_decoder_forward.1} parent=1 // pred_fallthru
      _
    // Predicated region
    $region42: #{attn_decoder_forward.1} parent=1 // pred_check
      _
    $region43: #{attn_decoder_forward.1} parent=1 // pred_check_branch
      %45 = sbr.rel (0) target = $region45
    $region44: #{attn_decoder_forward.1} parent=1 // pred_region
      _
    $region45: #{attn_decoder_forward.1} parent=1 // pred_fallthru
      _
    // Predicated region
    $region46: #{attn_decoder_forward.1} parent=1 // pred_check
      _
    $region47: #{attn_decoder_forward.1} parent=1 // pred_check_branch
      %47 = sbr.rel (0) target = $region49
    $region48: #{attn_decoder_forward.1} parent=1 // pred_region
      %49 = vsyncadd [#allocation3], 0
      %s50 = sshll.u32 %s11, 4
      %s51 = int_to_ptr.hbm [resolvable:$true] %s50
      %s52 = sshll.u32 [#allocation2], 4
      %s53 = int_to_ptr.vmem [resolvable:$true] %s52
      %58 = dma.hbm_to_vmem [thread:$0]  %s51, 3072, %s53, [#allocation3], 384, 384, 24
    $region49: #{attn_decoder_forward.1} parent=1 // pred_fallthru
      _
    // Predicated region
    $region50: #{attn_decoder_forward.1} parent=1 // pred_check
      _
    $region51: #{attn_decoder_forward.1} parent=1 // pred_check_branch
      %60 = sbr.rel (0) target = $region53
    $region52: #{attn_decoder_forward.1} parent=1 // pred_region
      %62 = vsyncadd [#allocation5], 0
      %s63 = sshll.u32 %s12, 4
      %s64 = int_to_ptr.hbm [resolvable:$true] %s63
      %s65 = sshll.u32 [#allocation4], 4
      %s66 = int_to_ptr.vmem [resolvable:$true] %s65
      %71 = dma.hbm_to_vmem [thread:$0]  %s64, 96, %s66, [#allocation5], 48, 48, 3
    $region53: #{attn_decoder_forward.1} parent=1 // pred_fallthru
      _
    // Predicated region
    $region54: #{attn_decoder_forward.1} parent=1 // pred_check
      _
    $region55: #{attn_decoder_forward.1} parent=1 // pred_check_branch
      %73 = sbr.rel (0) target = $region57
    $region56: #{attn_decoder_forward.1} parent=1 // pred_region
      %75 = vsyncadd [#allocation5], 0
      %s76 = sshll.u32 %s13, 4
      %s77 = int_to_ptr.hbm [resolvable:$true] %s76
      %s78 = sshll.u32 [#allocation6], 4
      %s79 = int_to_ptr.vmem [resolvable:$true] %s78
      %84 = dma.hbm_to_vmem [thread:$0]  %s77, 96, %s79, [#allocation5], 48, 48, 3
    $region57: #{attn_decoder_forward.1} parent=1 // pred_fallthru
      _
    // Predicated region
    $region58: #{attn_decoder_forward.1} parent=1 // pred_check
      _
    $region59: #{attn_decoder_forward.1} parent=1 // pred_check_branch
      %86 = sbr.rel (0) target = $region61
    $region60: #{attn_decoder_forward.1} parent=1 // pred_region
      %88 = vsyncadd [#allocation8], 0
      %s89 = sshll.u32 %s14, 4
      %s90 = int_to_ptr.hbm [resolvable:$true] %s89
      %s91 = sshll.u32 [#allocation7], 4
      %s92 = int_to_ptr.vmem [resolvable:$true] %s91
      %97 = dma.hbm_to_vmem [thread:$0]  %s90, 512, %s92, [#allocation8], 128, 128, 8
    $region61: #{attn_decoder_forward.1} parent=1 // pred_fallthru
      _
    // Predicated region
    $region62: #{attn_decoder_forward.1} parent=1 // pred_check
      _
    $region63: #{attn_decoder_forward.1} parent=1 // pred_check_branch
      %99 = sbr.rel (0) target = $region65
    $region64: #{attn_decoder_forward.1} parent=1 // pred_region
      %101 = vsyncadd [#allocation8], 0
      %s103 = sshll.u32 %s15, 4
      %s104 = int_to_ptr.hbm [resolvable:$true] %s103
      %s105 = sshll.u32 [#allocation9], 4
      %s106 = int_to_ptr.vmem [resolvable:$true] %s105
      %108 = dma.hbm_to_vmem [thread:$0]  %s104, 16, %s106, [#allocation8]
    $region65: #{attn_decoder_forward.1} parent=1 // pred_fallthru
      _
    // Predicated region
    $region66: #{attn_decoder_forward.1} parent=1 // pred_check
      _
    $region67: #{attn_decoder_forward.1} parent=1 // pred_check_branch
      %110 = sbr.rel (0) target = $region69
    $region68: #{attn_decoder_forward.1} parent=1 // pred_region
      %112 = dma.done [#allocation3], 3072
    $region69: #{attn_decoder_forward.1} parent=1 // pred_fallthru
      _
    // Predicated region
    $region70: #{attn_decoder_forward.1} parent=1 // pred_check
      _
    $region71: #{attn_decoder_forward.1} parent=1 // pred_check_branch
      %114 = sbr.rel (0) target = $region73
    $region72: #{attn_decoder_forward.1} parent=1 // pred_region
      %116 = dma.done [#allocation5], 96
    $region73: #{attn_decoder_forward.1} parent=1 // pred_fallthru
      _
    // Predicated region
    $region74: #{attn_decoder_forward.1} parent=1 // pred_check
      _
    $region75: #{attn_decoder_forward.1} parent=1 // pred_check_branch
      %118 = sbr.rel (0) target = $region77
    $region76: #{attn_decoder_forward.1} parent=1 // pred_region
      %120 = dma.done [#allocation5], 96
    $region77: #{attn_decoder_forward.1} parent=1 // pred_fallthru
      _
    // Predicated region
    $region78: #{attn_decoder_forward.1} parent=1 // pred_check
      _
    $region79: #{attn_decoder_forward.1} parent=1 // pred_check_branch
      %122 = sbr.rel (0) target = $region81
    $region80: #{attn_decoder_forward.1} parent=1 // pred_region
      %124 = dma.done [#allocation8], 512
    $region81: #{attn_decoder_forward.1} parent=1 // pred_fallthru
      _
    // Predicated region
    $region82: #{attn_decoder_forward.1} parent=1 // pred_check
      _
    $region83: #{attn_decoder_forward.1} parent=1 // pred_check_branch
      %126 = sbr.rel (0) target = $region85
    $region84: #{attn_decoder_forward.1} parent=1 // pred_region
      %128 = dma.done [#allocation8], 16
    $region85: #{attn_decoder_forward.1} parent=1 // pred_fallthru
      _
    %129 = vst [vmem:[%s16] sm:$0xff] 0.0
    %130 = vst [vmem:[%s16 + $0x8] sm:$0xff] 0.0
    %131 = vst [vmem:[%s16 + $0x10] sm:$0xff] 0.0
    %132 = vst [vmem:[%s16 + $0x18] sm:$0xff] 0.0
    %v133 = vld [vmem:[%s0] sm:$0xff]
    %v134 = vlaneseq
    %v135 = vand.u32 %v134, 127
    %136 = vset.pattern.permute.xlu0 0
    %137 = vperm.xlu0 %136, %v133
    %v138 = vpop.permute.xlu0 %137
    %vm139 = vcmp.eq.s32.totalorder %v135, %v138
    %v140 = vsel %vm139, 1, 0
    %v141 = vcvt.s32.f32 %v140
    %v142 = vld [vmem:[%s1] sm:$0xff]
    %v143 = vld [vmem:[%s1 + $0x8] sm:$0xff]
    %v144 = vld [vmem:[%s1 + $0x10] sm:$0xff]
    %v145 = vld [vmem:[%s1 + $0x18] sm:$0xff]
    %v146 = vld [vmem:[%s1 + $0x20] sm:$0xff]
    %v147 = vld [vmem:[%s1 + $0x28] sm:$0xff]
    %v148 = vld [vmem:[%s1 + $0x30] sm:$0xff]
    %v149 = vld [vmem:[%s1 + $0x38] sm:$0xff]
    %vm150 = vcmask 523264
    %v152 = vsel %vm150, %v141, 0
    %154 = vmatpush.msra.mxu0 0.0
    %155 = vmatpush.msra.mxu0 0.0
    %156 = vmatpush.msra.mxu0 0.0
    %157 = vmatpush.msra.mxu0 0.0
    %158 = vmatpush.msra.mxu0 0.0
    %159 = vmatpush.msra.mxu0 0.0
    %160 = vmatpush.msra.mxu0 0.0
    %161 = vmatpush.msra.mxu0 0.0
    %162 = vmatpush.msra.mxu0 %v149
    %163 = vmatpush.msra.mxu0 %v148
    %164 = vmatpush.msra.mxu0 %v147
    %165 = vmatpush.msra.mxu0 %v146
    %166 = vmatpush.msra.mxu0 %v145
    %167 = vmatpush.msra.mxu0 %v144
    %168 = vmatpush.msra.mxu0 %v143
    %169 = vmatpush.msra.mxu0 %v142
    %170 = vmatmul.f32.gmra.mxu0 %v152
    %v171 = vpop.f32.mrf.mxu0
    %v172 = vadd.f32 0.0, %v171
    %173 = vdwg.mxu0
    %v174 = vld [vmem:[%s2] sm:$0xff]
    %v175 = vld [vmem:[%s4] sm:$0xff]
    %v176 = vld [vmem:[%s4 + $0x8] sm:$0xff]
    %v177 = vld [vmem:[%s4 + $0x10] sm:$0xff]
    %v178 = vld [vmem:[%s4 + $0x18] sm:$0xff]
    %v179 = vld [vmem:[%s5] sm:$0xff]
    %v180 = vld [vmem:[%s5 + $0x8] sm:$0xff]
    %v181 = vld [vmem:[%s5 + $0x10] sm:$0xff]
    %v182 = vld [vmem:[%s5 + $0x18] sm:$0xff]
    %vm183 = vcmask 261120
    %v185 = vsel %vm183, %v174, 0
    %187 = vmatpush.msra.mxu0 0.0
    %188 = vmatpush.msra.mxu0 0.0
    %189 = vmatpush.msra.mxu0 0.0
    %190 = vmatpush.msra.mxu0 0.0
    %191 = vmatpush.msra.mxu0 0.0
    %192 = vmatpush.msra.mxu0 0.0
    %193 = vmatpush.msra.mxu0 0.0
    %194 = vmatpush.msra.mxu0 0.0
    %195 = vmatpush.msra.mxu0 0.0
    %196 = vmatpush.msra.mxu0 0.0
    %197 = vmatpush.msra.mxu0 0.0
    %198 = vmatpush.msra.mxu0 0.0
    %199 = vmatpush.msra.mxu0 %v182
    %200 = vmatpush.msra.mxu0 %v181
    %201 = vmatpush.msra.mxu0 %v180
    %202 = vmatpush.msra.mxu0 %v179
    %203 = vmatmul.f32.gmra.mxu0 %v185
    %v204 = vpop.f32.mrf.mxu0
    %v205 = vadd.f32 0.0, %v204
    %206 = vdwg.mxu0
    %v208 = vsel %vm183, %v172, 0
    %210 = vmatpush.msra.mxu0 0.0
    %211 = vmatpush.msra.mxu0 0.0
    %212 = vmatpush.msra.mxu0 0.0
    %213 = vmatpush.msra.mxu0 0.0
    %214 = vmatpush.msra.mxu0 0.0
    %215 = vmatpush.msra.mxu0 0.0
    %216 = vmatpush.msra.mxu0 0.0
    %217 = vmatpush.msra.mxu0 0.0
    %218 = vmatpush.msra.mxu0 0.0
    %219 = vmatpush.msra.mxu0 0.0
    %220 = vmatpush.msra.mxu0 0.0
    %221 = vmatpush.msra.mxu0 0.0
    %222 = vmatpush.msra.mxu0 %v178
    %223 = vmatpush.msra.mxu0 %v177
    %224 = vmatpush.msra.mxu0 %v176
    %225 = vmatpush.msra.mxu0 %v175
    %226 = vmatmul.f32.gmra.mxu0 %v208
    %v227 = vpop.f32.mrf.mxu0
    %v228 = vadd.f32 %v205, %v227
    %229 = vdwg.mxu0
    %v230 = vld [vmem:[%s6] sm:$0x1]
    %v232 = vperm.slane %v230, 0
    %v234 = vadd.f32 %v228, %v232
    %vm235 = vcmask 130048
    %v236 = vsel %vm235, %v234, -inf
    %237 = vmax.xlane.f32.xlu0 %v236
    %v238 = vpop.xlane.xlu0 %237
    %v239 = vsub.f32 %v234, %v238
    %v240 = vmul.f32 %v239, 1.442695
    %v241 = vpow.pop %v240
    %v242 = vsel %vm235, %v241, 0.0
    %243 = vadd.xlane.f32.xlu0 %v242
    %v244 = vpop.xlane.xlu0 %243
    %v245 = vrcp.pop %v244
    %v246 = vmul.f32 %v241, %v245
    %v247 = vperm.slane %v246, 0
    %v248 = vlaneseq
    %v249 = vshrl.u32 %v248, 7
    %251 = vset.pattern.permute.xlu0 %v249
    %252 = vperm.xlu0 %251, %v247
    %v253 = vpop.permute.xlu0 %252
    %v254 = vlaneseq
    %v255 = vshrl.u32 %v254, 7
    %v256 = vadd.s32 %v255, 8
    %257 = vset.pattern.permute.xlu0 %v256
    %258 = vperm.xlu0 %257, %v247
    %v259 = vpop.permute.xlu0 %258
    %v260 = vperm.slane %v246, 1
    %v261 = vlaneseq
    %v262 = vshrl.u32 %v261, 7
    %264 = vset.pattern.permute.xlu0 %v262
    %265 = vperm.xlu0 %264, %v260
    %v266 = vpop.permute.xlu0 %265
    %v267 = vlaneseq
    %v268 = vshrl.u32 %v267, 7
    %v269 = vadd.s32 %v268, 8
    %270 = vset.pattern.permute.xlu0 %v269
    %271 = vperm.xlu0 %270, %v260
    %v272 = vpop.permute.xlu0 %271
    %v273 = vperm.slane %v246, 2
    %v274 = vlaneseq
    %v275 = vshrl.u32 %v274, 7
    %277 = vset.pattern.permute.xlu0 %v275
    %278 = vperm.xlu0 %277, %v273
    %v279 = vpop.permute.xlu0 %278
    %v280 = vlaneseq
    %v281 = vshrl.u32 %v280, 7
    %v282 = vadd.s32 %v281, 8
    %283 = vset.pattern.permute.xlu0 %v282
    %284 = vperm.xlu0 %283, %v273
    %v285 = vpop.permute.xlu0 %284
    %v286 = vperm.slane %v246, 3
    %v287 = vlaneseq
    %v288 = vshrl.u32 %v287, 7
    %290 = vset.pattern.permute.xlu0 %v288
    %291 = vperm.xlu0 %290, %v286
    %v292 = vpop.permute.xlu0 %291
    %v293 = vlaneseq
    %v294 = vshrl.u32 %v293, 7
    %v295 = vadd.s32 %v294, 8
    %296 = vset.pattern.permute.xlu0 %v295
    %297 = vperm.xlu0 %296, %v286
    %v298 = vpop.permute.xlu0 %297
    %v299 = vperm.slane %v246, 4
    %v300 = vlaneseq
    %v301 = vshrl.u32 %v300, 7
    %303 = vset.pattern.permute.xlu0 %v301
    %304 = vperm.xlu0 %303, %v299
    %v305 = vpop.permute.xlu0 %304
    %v306 = vlaneseq
    %v307 = vshrl.u32 %v306, 7
    %v308 = vadd.s32 %v307, 8
    %309 = vset.pattern.permute.xlu0 %v308
    %310 = vperm.xlu0 %309, %v299
    %v311 = vpop.permute.xlu0 %310
    %v312 = vperm.slane %v246, 5
    %v313 = vlaneseq
    %v314 = vshrl.u32 %v313, 7
    %316 = vset.pattern.permute.xlu0 %v314
    %317 = vperm.xlu0 %316, %v312
    %v318 = vpop.permute.xlu0 %317
    %v319 = vlaneseq
    %v320 = vshrl.u32 %v319, 7
    %v321 = vadd.s32 %v320, 8
    %322 = vset.pattern.permute.xlu0 %v321
    %323 = vperm.xlu0 %322, %v312
    %v324 = vpop.permute.xlu0 %323
    %v325 = vperm.slane %v246, 6
    %v326 = vlaneseq
    %v327 = vshrl.u32 %v326, 7
    %329 = vset.pattern.permute.xlu0 %v327
    %330 = vperm.xlu0 %329, %v325
    %v331 = vpop.permute.xlu0 %330
    %v332 = vlaneseq
    %v333 = vshrl.u32 %v332, 7
    %v334 = vadd.s32 %v333, 8
    %335 = vset.pattern.permute.xlu0 %v334
    %336 = vperm.xlu0 %335, %v325
    %v337 = vpop.permute.xlu0 %336
    %v338 = vperm.slane %v246, 7
    %v339 = vlaneseq
    %v340 = vshrl.u32 %v339, 7
    %342 = vset.pattern.permute.xlu0 %v340
    %343 = vperm.xlu0 %342, %v338
    %v344 = vpop.permute.xlu0 %343
    %v345 = vlaneseq
    %v346 = vshrl.u32 %v345, 7
    %v347 = vadd.s32 %v346, 8
    %348 = vset.pattern.permute.xlu0 %v347
    %349 = vperm.xlu0 %348, %v338
    %v350 = vpop.permute.xlu0 %349
    %v351 = vld [vmem:[%s3] sm:$0xff]
    %v352 = vld [vmem:[%s3 + $0x8] sm:$0xff]
    %v353 = vld [vmem:[%s3 + $0x10] sm:$0xff]
    %v354 = vld [vmem:[%s3 + $0x18] sm:$0xff]
    %v355 = vld [vmem:[%s3 + $0x20] sm:$0xff]
    %v356 = vld [vmem:[%s3 + $0x28] sm:$0xff]
    %v357 = vld [vmem:[%s3 + $0x30] sm:$0xff]
    %v358 = vld [vmem:[%s3 + $0x38] sm:$0xff]
    %v359 = vld [vmem:[%s3 + $0x40] sm:$0xff]
    %v360 = vld [vmem:[%s3 + $0x48] sm:$0xff]
    %v361 = vld [vmem:[%s3 + $0x50] sm:$0xff]
    %v362 = vld [vmem:[%s3 + $0x58] sm:$0xff]
    %v363 = vld [vmem:[%s3 + $0x60] sm:$0xff]
    %v364 = vld [vmem:[%s3 + $0x68] sm:$0xff]
    %v365 = vld [vmem:[%s3 + $0x70] sm:$0xff]
    %v366 = vld [vmem:[%s3 + $0x78] sm:$0xff]
    %v367 = vmul.f32 %v253, %v351
    %v368 = vmul.f32 %v259, %v352
    %v369 = vmul.f32 %v266, %v353
    %v370 = vmul.f32 %v272, %v354
    %v371 = vmul.f32 %v279, %v355
    %v372 = vmul.f32 %v285, %v356
    %v373 = vmul.f32 %v292, %v357
    %v374 = vmul.f32 %v298, %v358
    %v375 = vmul.f32 %v305, %v359
    %v376 = vmul.f32 %v311, %v360
    %v377 = vmul.f32 %v318, %v361
    %v378 = vmul.f32 %v324, %v362
    %v379 = vmul.f32 %v331, %v363
    %v380 = vmul.f32 %v337, %v364
    %v381 = vmul.f32 %v344, %v365
    %v382 = vmul.f32 %v350, %v366
    %v383 = vsel %vm183, %v367, 0.0
    %v384 = vsel %vm183, %v368, 0.0
    %v385 = vadd.f32 %v383, %v384
    %v386 = vrot.slane %v385, 4
    %v387 = vadd.f32 %v385, %v386
    %v388 = vrot.slane %v387, 2
    %v389 = vadd.f32 %v387, %v388
    %v390 = vrot.slane %v389, 1
    %v391 = vadd.f32 %v389, %v390
    %v392 = vsel %vm183, %v369, 0.0
    %v393 = vsel %vm183, %v370, 0.0
    %v394 = vadd.f32 %v392, %v393
    %v395 = vrot.slane %v394, 4
    %v396 = vadd.f32 %v394, %v395
    %v397 = vrot.slane %v396, 2
    %v398 = vadd.f32 %v396, %v397
    %v399 = vrot.slane %v398, 1
    %v400 = vadd.f32 %v398, %v399
    %v401 = vsel %vm183, %v371, 0.0
    %v402 = vsel %vm183, %v372, 0.0
    %v403 = vadd.f32 %v401, %v402
    %v404 = vrot.slane %v403, 4
    %v405 = vadd.f32 %v403, %v404
    %v406 = vrot.slane %v405, 2
    %v407 = vadd.f32 %v405, %v406
    %v408 = vrot.slane %v407, 1
    %v409 = vadd.f32 %v407, %v408
    %v410 = vsel %vm183, %v373, 0.0
    %v411 = vsel %vm183, %v374, 0.0
    %v412 = vadd.f32 %v410, %v411
    %v413 = vrot.slane %v412, 4
    %v414 = vadd.f32 %v412, %v413
    %v415 = vrot.slane %v414, 2
    %v416 = vadd.f32 %v414, %v415
    %v417 = vrot.slane %v416, 1
    %v418 = vadd.f32 %v416, %v417
    %v419 = vsel %vm183, %v375, 0.0
    %v420 = vsel %vm183, %v376, 0.0
    %v421 = vadd.f32 %v419, %v420
    %v422 = vrot.slane %v421, 4
    %v423 = vadd.f32 %v421, %v422
    %v424 = vrot.slane %v423, 2
    %v425 = vadd.f32 %v423, %v424
    %v426 = vrot.slane %v425, 1
    %v427 = vadd.f32 %v425, %v426
    %v428 = vsel %vm183, %v377, 0.0
    %v429 = vsel %vm183, %v378, 0.0
    %v430 = vadd.f32 %v428, %v429
    %v431 = vrot.slane %v430, 4
    %v432 = vadd.f32 %v430, %v431
    %v433 = vrot.slane %v432, 2
    %v434 = vadd.f32 %v432, %v433
    %v435 = vrot.slane %v434, 1
    %v436 = vadd.f32 %v434, %v435
    %v437 = vsel %vm183, %v379, 0.0
    %v438 = vsel %vm183, %v380, 0.0
    %v439 = vadd.f32 %v437, %v438
    %v440 = vrot.slane %v439, 4
    %v441 = vadd.f32 %v439, %v440
    %v442 = vrot.slane %v441, 2
    %v443 = vadd.f32 %v441, %v442
    %v444 = vrot.slane %v443, 1
    %v445 = vadd.f32 %v443, %v444
    %v446 = vsel %vm183, %v381, 0.0
    %v447 = vsel %vm183, %v382, 0.0
    %v448 = vadd.f32 %v446, %v447
    %v449 = vrot.slane %v448, 4
    %v450 = vadd.f32 %v448, %v449
    %v451 = vrot.slane %v450, 2
    %v452 = vadd.f32 %v450, %v451
    %v453 = vrot.slane %v452, 1
    %v454 = vadd.f32 %v452, %v453
    %v455 = vld [vmem:[%s7] sm:$0xff]
    %v456 = vld [vmem:[%s7 + $0x8] sm:$0xff]
    %v457 = vld [vmem:[%s7 + $0x10] sm:$0xff]
    %v458 = vld [vmem:[%s7 + $0x18] sm:$0xff]
    %v459 = vld [vmem:[%s8] sm:$0xff]
    %v460 = vld [vmem:[%s8 + $0x8] sm:$0xff]
    %v461 = vld [vmem:[%s8 + $0x10] sm:$0xff]
    %v462 = vld [vmem:[%s8 + $0x18] sm:$0xff]
    %vm471 = vcmask 1041409
    %v472 = vsel %vm471, %v400, %v391
    %vm473 = vcmask 1042434
    %v474 = vsel %vm473, %v409, %v472
    %vm475 = vcmask 1043459
    %v476 = vsel %vm475, %v418, %v474
    %vm477 = vcmask 1044484
    %v478 = vsel %vm477, %v427, %v476
    %vm479 = vcmask 1045509
    %v480 = vsel %vm479, %v436, %v478
    %vm481 = vcmask 1046534
    %v482 = vsel %vm481, %v445, %v480
    %vm483 = vcmask 1047559
    %v484 = vsel %vm483, %v454, %v482
    %v485 = vsel %vm183, %v484, 0
    %487 = vmatpush.msra.mxu0 0.0
    %488 = vmatpush.msra.mxu0 0.0
    %489 = vmatpush.msra.mxu0 0.0
    %490 = vmatpush.msra.mxu0 0.0
    %491 = vmatpush.msra.mxu0 0.0
    %492 = vmatpush.msra.mxu0 0.0
    %493 = vmatpush.msra.mxu0 0.0
    %494 = vmatpush.msra.mxu0 0.0
    %495 = vmatpush.msra.mxu0 0.0
    %496 = vmatpush.msra.mxu0 0.0
    %497 = vmatpush.msra.mxu0 0.0
    %498 = vmatpush.msra.mxu0 0.0
    %499 = vmatpush.msra.mxu0 %v462
    %500 = vmatpush.msra.mxu0 %v461
    %501 = vmatpush.msra.mxu0 %v460
    %502 = vmatpush.msra.mxu0 %v459
    %503 = vmatmul.f32.gmra.mxu0 %v485
    %v504 = vpop.f32.mrf.mxu0
    %v505 = vadd.f32 0.0, %v504
    %506 = vdwg.mxu0
    %507 = vmatpush.msra.mxu0 0.0
    %508 = vmatpush.msra.mxu0 0.0
    %509 = vmatpush.msra.mxu0 0.0
    %510 = vmatpush.msra.mxu0 0.0
    %511 = vmatpush.msra.mxu0 0.0
    %512 = vmatpush.msra.mxu0 0.0
    %513 = vmatpush.msra.mxu0 0.0
    %514 = vmatpush.msra.mxu0 0.0
    %515 = vmatpush.msra.mxu0 0.0
    %516 = vmatpush.msra.mxu0 0.0
    %517 = vmatpush.msra.mxu0 0.0
    %518 = vmatpush.msra.mxu0 0.0
    %519 = vmatpush.msra.mxu0 %v458
    %520 = vmatpush.msra.mxu0 %v457
    %521 = vmatpush.msra.mxu0 %v456
    %522 = vmatpush.msra.mxu0 %v455
    %523 = vmatmul.f32.gmra.mxu0 %v208
    %v524 = vpop.f32.mrf.mxu0
    %v525 = vadd.f32 %v505, %v524
    %526 = vdwg.mxu0
    %v527 = vld [vmem:[%s9] sm:$0x1]
    %v529 = vperm.slane %v527, 0
    %v531 = vadd.f32 %v525, %v529
    %v532 = vmax.f32 %v531, 0.0
    %v533 = vld [vmem:[%s10] sm:$0xff]
    %v534 = vld [vmem:[%s10 + $0x8] sm:$0xff]
    %v535 = vld [vmem:[%s10 + $0x10] sm:$0xff]
    %v536 = vld [vmem:[%s10 + $0x18] sm:$0xff]
    %v537 = vld [vmem:[%s10 + $0x20] sm:$0xff]
    %v538 = vld [vmem:[%s10 + $0x28] sm:$0xff]
    %v539 = vld [vmem:[%s10 + $0x30] sm:$0xff]
    %v540 = vld [vmem:[%s10 + $0x38] sm:$0xff]
    %v541 = vld [vmem:[%s10 + $0x40] sm:$0xff]
    %v542 = vld [vmem:[%s10 + $0x48] sm:$0xff]
    %v543 = vld [vmem:[%s10 + $0x50] sm:$0xff]
    %v544 = vld [vmem:[%s10 + $0x58] sm:$0xff]
    %v545 = vld [vmem:[#allocation4] sm:$0x7]
    %v547 = vperm.slane %v545, 0
    %v548 = vperm.slane %v545, 1
    %v549 = vperm.slane %v545, 2
    %v554 = vsel %vm183, %v532, 0
    %556 = vmatpush.msra.mxu0 0.0
    %557 = vmatpush.msra.mxu0 0.0
    %558 = vmatpush.msra.mxu0 0.0
    %559 = vmatpush.msra.mxu0 0.0
    %560 = vmatpush.msra.mxu0 0.0
    %561 = vmatpush.msra.mxu0 0.0
    %562 = vmatpush.msra.mxu0 0.0
    %563 = vmatpush.msra.mxu0 0.0
    %564 = vmatpush.msra.mxu0 0.0
    %565 = vmatpush.msra.mxu0 0.0
    %566 = vmatpush.msra.mxu0 0.0
    %567 = vmatpush.msra.mxu0 0.0
    %568 = vmatpush.msra.mxu0 %v542
    %569 = vmatpush.msra.mxu0 %v539
    %570 = vmatpush.msra.mxu0 %v536
    %571 = vmatpush.msra.mxu0 %v533
    %572 = vmatmul.f32.gmra.mxu0 %v554
    %v573 = vpop.f32.mrf.mxu0
    %v574 = vadd.f32 %v547, %v573
    %575 = vdwg.mxu0
    %576 = vmatpush.msra.mxu0 0.0
    %577 = vmatpush.msra.mxu0 0.0
    %578 = vmatpush.msra.mxu0 0.0
    %579 = vmatpush.msra.mxu0 0.0
    %580 = vmatpush.msra.mxu0 0.0
    %581 = vmatpush.msra.mxu0 0.0
    %582 = vmatpush.msra.mxu0 0.0
    %583 = vmatpush.msra.mxu0 0.0
    %584 = vmatpush.msra.mxu0 0.0
    %585 = vmatpush.msra.mxu0 0.0
    %586 = vmatpush.msra.mxu0 0.0
    %587 = vmatpush.msra.mxu0 0.0
    %588 = vmatpush.msra.mxu0 %v543
    %589 = vmatpush.msra.mxu0 %v540
    %590 = vmatpush.msra.mxu0 %v537
    %591 = vmatpush.msra.mxu0 %v534
    %592 = vmatmul.f32.gmra.mxu0 %v554
    %v593 = vpop.f32.mrf.mxu0
    %v594 = vadd.f32 %v548, %v593
    %595 = vdwg.mxu0
    %596 = vmatpush.msra.mxu0 0.0
    %597 = vmatpush.msra.mxu0 0.0
    %598 = vmatpush.msra.mxu0 0.0
    %599 = vmatpush.msra.mxu0 0.0
    %600 = vmatpush.msra.mxu0 0.0
    %601 = vmatpush.msra.mxu0 0.0
    %602 = vmatpush.msra.mxu0 0.0
    %603 = vmatpush.msra.mxu0 0.0
    %604 = vmatpush.msra.mxu0 0.0
    %605 = vmatpush.msra.mxu0 0.0
    %606 = vmatpush.msra.mxu0 0.0
    %607 = vmatpush.msra.mxu0 0.0
    %608 = vmatpush.msra.mxu0 %v544
    %609 = vmatpush.msra.mxu0 %v541
    %610 = vmatpush.msra.mxu0 %v538
    %611 = vmatpush.msra.mxu0 %v535
    %612 = vmatmul.f32.gmra.mxu0 %v554
    %v613 = vpop.f32.mrf.mxu0
    %v614 = vadd.f32 %v549, %v613
    %615 = vdwg.mxu0
    %v616 = vld [vmem:[#allocation2] sm:$0xff]
    %v617 = vld [vmem:[#allocation2 + $0x8] sm:$0xff]
    %v618 = vld [vmem:[#allocation2 + $0x10] sm:$0xff]
    %v619 = vld [vmem:[#allocation2 + $0x18] sm:$0xff]
    %v620 = vld [vmem:[#allocation2 + $0x20] sm:$0xff]
    %v621 = vld [vmem:[#allocation2 + $0x28] sm:$0xff]
    %v622 = vld [vmem:[#allocation2 + $0x30] sm:$0xff]
    %v623 = vld [vmem:[#allocation2 + $0x38] sm:$0xff]
    %v624 = vld [vmem:[#allocation2 + $0x40] sm:$0xff]
    %v625 = vld [vmem:[#allocation2 + $0x48] sm:$0xff]
    %v626 = vld [vmem:[#allocation2 + $0x50] sm:$0xff]
    %v627 = vld [vmem:[#allocation2 + $0x58] sm:$0xff]
    %v628 = vld [vmem:[#allocation6] sm:$0x7]
    %v630 = vperm.slane %v628, 0
    %v631 = vperm.slane %v628, 1
    %v632 = vperm.slane %v628, 2
    %636 = vmatpush.msra.mxu0 0.0
    %637 = vmatpush.msra.mxu0 0.0
    %638 = vmatpush.msra.mxu0 0.0
    %639 = vmatpush.msra.mxu0 0.0
    %640 = vmatpush.msra.mxu0 0.0
    %641 = vmatpush.msra.mxu0 0.0
    %642 = vmatpush.msra.mxu0 0.0
    %643 = vmatpush.msra.mxu0 0.0
    %644 = vmatpush.msra.mxu0 0.0
    %645 = vmatpush.msra.mxu0 0.0
    %646 = vmatpush.msra.mxu0 0.0
    %647 = vmatpush.msra.mxu0 0.0
    %648 = vmatpush.msra.mxu0 %v625
    %649 = vmatpush.msra.mxu0 %v622
    %650 = vmatpush.msra.mxu0 %v619
    %651 = vmatpush.msra.mxu0 %v616
    %652 = vmatmul.f32.gmra.mxu0 %v185
    %v653 = vpop.f32.mrf.mxu0
    %v654 = vadd.f32 %v630, %v653
    %655 = vdwg.mxu0
    %656 = vmatpush.msra.mxu0 0.0
    %657 = vmatpush.msra.mxu0 0.0
    %658 = vmatpush.msra.mxu0 0.0
    %659 = vmatpush.msra.mxu0 0.0
    %660 = vmatpush.msra.mxu0 0.0
    %661 = vmatpush.msra.mxu0 0.0
    %662 = vmatpush.msra.mxu0 0.0
    %663 = vmatpush.msra.mxu0 0.0
    %664 = vmatpush.msra.mxu0 0.0
    %665 = vmatpush.msra.mxu0 0.0
    %666 = vmatpush.msra.mxu0 0.0
    %667 = vmatpush.msra.mxu0 0.0
    %668 = vmatpush.msra.mxu0 %v626
    %669 = vmatpush.msra.mxu0 %v623
    %670 = vmatpush.msra.mxu0 %v620
    %671 = vmatpush.msra.mxu0 %v617
    %672 = vmatmul.f32.gmra.mxu0 %v185
    %v673 = vpop.f32.mrf.mxu0
    %v674 = vadd.f32 %v631, %v673
    %675 = vdwg.mxu0
    %676 = vmatpush.msra.mxu0 0.0
    %677 = vmatpush.msra.mxu0 0.0
    %678 = vmatpush.msra.mxu0 0.0
    %679 = vmatpush.msra.mxu0 0.0
    %680 = vmatpush.msra.mxu0 0.0
    %681 = vmatpush.msra.mxu0 0.0
    %682 = vmatpush.msra.mxu0 0.0
    %683 = vmatpush.msra.mxu0 0.0
    %684 = vmatpush.msra.mxu0 0.0
    %685 = vmatpush.msra.mxu0 0.0
    %686 = vmatpush.msra.mxu0 0.0
    %687 = vmatpush.msra.mxu0 0.0
    %688 = vmatpush.msra.mxu0 %v627
    %689 = vmatpush.msra.mxu0 %v624
    %690 = vmatpush.msra.mxu0 %v621
    %691 = vmatpush.msra.mxu0 %v618
    %692 = vmatmul.f32.gmra.mxu0 %v185
    %v693 = vpop.f32.mrf.mxu0
    %v694 = vadd.f32 %v632, %v693
    %695 = vdwg.mxu0
    %v696 = vadd.f32 %v574, %v654
    %v697 = vxor.u32 %v696, 2147483648
    %v698 = vmul.f32 %v697, 1.442695
    %v699 = vpow.pop %v698
    %v700 = vadd.f32 %v699, 1.0
    %v701 = vrcp.pop %v700
    %v702 = vmul.f32 %v700, %v701
    %v703 = vsub.f32 1.0, %v702
    %v704 = vmul.f32 %v701, %v703
    %v705 = vadd.f32 %v701, %v704
    %vm706 = vweird.f32 %v700
    %vm707 = vweird.f32 %v701
    %vm708 = vmor %vm706, %vm707
    %v709 = vsel %vm708, %v701, %v705
    %v710 = vand.u32 2147483647, %v700
    %vm711 = vcmp.eq.f32.partialorder %v710, 8.507059e+37
    %v712 = vand.u32 %v700, 2147483648
    %v713 = vor.u32 1.1754944e-38, %v712
    %v714 = vsel %vm711, %v713, %v709
    %v715 = vmul.f32 1.0, %v714
    %v716 = vadd.f32 %v594, %v674
    %v717 = vxor.u32 %v716, 2147483648
    %v718 = vmul.f32 %v717, 1.442695
    %v719 = vpow.pop %v718
    %v720 = vadd.f32 %v719, 1.0
    %v721 = vrcp.pop %v720
    %v722 = vmul.f32 %v720, %v721
    %v723 = vsub.f32 1.0, %v722
    %v724 = vmul.f32 %v721, %v723
    %v725 = vadd.f32 %v721, %v724
    %vm726 = vweird.f32 %v720
    %vm727 = vweird.f32 %v721
    %vm728 = vmor %vm726, %vm727
    %v729 = vsel %vm728, %v721, %v725
    %v730 = vand.u32 2147483647, %v720
    %vm731 = vcmp.eq.f32.partialorder %v730, 8.507059e+37
    %v732 = vand.u32 %v720, 2147483648
    %v733 = vor.u32 1.1754944e-38, %v732
    %v734 = vsel %vm731, %v733, %v729
    %v735 = vmul.f32 1.0, %v734
    %v736 = vmul.f32 %v715, %v694
    %v737 = vadd.f32 %v614, %v736
    %v738 = vtanh.pop %v737
    %v739 = vsub.f32 1.0, %v735
    %v740 = vmul.f32 %v739, %v738
    %v741 = vmul.f32 %v735, %v174
    %v742 = vadd.f32 %v740, %v741
    %743 = vst.msk [vmem:[%s16 + $0x8] sm:$0xff] %vm183, %v742
    %s744 = scalar_lea.vmem %s2, 8
    %v745 = vld [vmem:[%s744] sm:$0xff]
    %s746 = scalar_lea.vmem %s10, 96
    %v747 = vld [vmem:[%s746] sm:$0xff]
    %v748 = vld [vmem:[%s746 + $0x8] sm:$0xff]
    %v749 = vld [vmem:[%s746 + $0x10] sm:$0xff]
    %v750 = vld [vmem:[%s746 + $0x18] sm:$0xff]
    %v751 = vld [vmem:[%s746 + $0x20] sm:$0xff]
    %v752 = vld [vmem:[%s746 + $0x28] sm:$0xff]
    %v753 = vld [vmem:[%s746 + $0x30] sm:$0xff]
    %v754 = vld [vmem:[%s746 + $0x38] sm:$0xff]
    %v755 = vld [vmem:[%s746 + $0x40] sm:$0xff]
    %v756 = vld [vmem:[%s746 + $0x48] sm:$0xff]
    %v757 = vld [vmem:[%s746 + $0x50] sm:$0xff]
    %v758 = vld [vmem:[%s746 + $0x58] sm:$0xff]
    %s759 = scalar_lea.vmem [#allocation4], 3
    %v760 = vld [vmem:[%s759] sm:$0x7]
    %v762 = vperm.slane %v760, 0
    %v763 = vperm.slane %v760, 1
    %v764 = vperm.slane %v760, 2
    %v769 = vsel %vm183, %v742, 0
    %771 = vmatpush.msra.mxu0 0.0
    %772 = vmatpush.msra.mxu0 0.0
    %773 = vmatpush.msra.mxu0 0.0
    %774 = vmatpush.msra.mxu0 0.0
    %775 = vmatpush.msra.mxu0 0.0
    %776 = vmatpush.msra.mxu0 0.0
    %777 = vmatpush.msra.mxu0 0.0
    %778 = vmatpush.msra.mxu0 0.0
    %779 = vmatpush.msra.mxu0 0.0
    %780 = vmatpush.msra.mxu0 0.0
    %781 = vmatpush.msra.mxu0 0.0
    %782 = vmatpush.msra.mxu0 0.0
    %783 = vmatpush.msra.mxu0 %v756
    %784 = vmatpush.msra.mxu0 %v753
    %785 = vmatpush.msra.mxu0 %v750
    %786 = vmatpush.msra.mxu0 %v747
    %787 = vmatmul.f32.gmra.mxu0 %v769
    %v788 = vpop.f32.mrf.mxu0
    %v789 = vadd.f32 %v762, %v788
    %790 = vdwg.mxu0
    %791 = vmatpush.msra.mxu0 0.0
    %792 = vmatpush.msra.mxu0 0.0
    %793 = vmatpush.msra.mxu0 0.0
    %794 = vmatpush.msra.mxu0 0.0
    %795 = vmatpush.msra.mxu0 0.0
    %796 = vmatpush.msra.mxu0 0.0
    %797 = vmatpush.msra.mxu0 0.0
    %798 = vmatpush.msra.mxu0 0.0
    %799 = vmatpush.msra.mxu0 0.0
    %800 = vmatpush.msra.mxu0 0.0
    %801 = vmatpush.msra.mxu0 0.0
    %802 = vmatpush.msra.mxu0 0.0
    %803 = vmatpush.msra.mxu0 %v757
    %804 = vmatpush.msra.mxu0 %v754
    %805 = vmatpush.msra.mxu0 %v751
    %806 = vmatpush.msra.mxu0 %v748
    %807 = vmatmul.f32.gmra.mxu0 %v769
    %v808 = vpop.f32.mrf.mxu0
    %v809 = vadd.f32 %v763, %v808
    %810 = vdwg.mxu0
    %811 = vmatpush.msra.mxu0 0.0
    %812 = vmatpush.msra.mxu0 0.0
    %813 = vmatpush.msra.mxu0 0.0
    %814 = vmatpush.msra.mxu0 0.0
    %815 = vmatpush.msra.mxu0 0.0
    %816 = vmatpush.msra.mxu0 0.0
    %817 = vmatpush.msra.mxu0 0.0
    %818 = vmatpush.msra.mxu0 0.0
    %819 = vmatpush.msra.mxu0 0.0
    %820 = vmatpush.msra.mxu0 0.0
    %821 = vmatpush.msra.mxu0 0.0
    %822 = vmatpush.msra.mxu0 0.0
    %823 = vmatpush.msra.mxu0 %v758
    %824 = vmatpush.msra.mxu0 %v755
    %825 = vmatpush.msra.mxu0 %v752
    %826 = vmatpush.msra.mxu0 %v749
    %827 = vmatmul.f32.gmra.mxu0 %v769
    %v828 = vpop.f32.mrf.mxu0
    %v829 = vadd.f32 %v764, %v828
    %830 = vdwg.mxu0
    %s831 = scalar_lea.vmem [#allocation2], 96
    %v832 = vld [vmem:[%s831] sm:$0xff]
    %v833 = vld [vmem:[%s831 + $0x8] sm:$0xff]
    %v834 = vld [vmem:[%s831 + $0x10] sm:$0xff]
    %v835 = vld [vmem:[%s831 + $0x18] sm:$0xff]
    %v836 = vld [vmem:[%s831 + $0x20] sm:$0xff]
    %v837 = vld [vmem:[%s831 + $0x28] sm:$0xff]
    %v838 = vld [vmem:[%s831 + $0x30] sm:$0xff]
    %v839 = vld [vmem:[%s831 + $0x38] sm:$0xff]
    %v840 = vld [vmem:[%s831 + $0x40] sm:$0xff]
    %v841 = vld [vmem:[%s831 + $0x48] sm:$0xff]
    %v842 = vld [vmem:[%s831 + $0x50] sm:$0xff]
    %v843 = vld [vmem:[%s831 + $0x58] sm:$0xff]
    %s844 = scalar_lea.vmem [#allocation6], 3
    %v845 = vld [vmem:[%s844] sm:$0x7]
    %v847 = vperm.slane %v845, 0
    %v848 = vperm.slane %v845, 1
    %v849 = vperm.slane %v845, 2
    %v854 = vsel %vm183, %v745, 0
    %856 = vmatpush.msra.mxu0 0.0
    %857 = vmatpush.msra.mxu0 0.0
    %858 = vmatpush.msra.mxu0 0.0
    %859 = vmatpush.msra.mxu0 0.0
    %860 = vmatpush.msra.mxu0 0.0
    %861 = vmatpush.msra.mxu0 0.0
    %862 = vmatpush.msra.mxu0 0.0
    %863 = vmatpush.msra.mxu0 0.0
    %864 = vmatpush.msra.mxu0 0.0
    %865 = vmatpush.msra.mxu0 0.0
    %866 = vmatpush.msra.mxu0 0.0
    %867 = vmatpush.msra.mxu0 0.0
    %868 = vmatpush.msra.mxu0 %v841
    %869 = vmatpush.msra.mxu0 %v838
    %870 = vmatpush.msra.mxu0 %v835
    %871 = vmatpush.msra.mxu0 %v832
    %872 = vmatmul.f32.gmra.mxu0 %v854
    %v873 = vpop.f32.mrf.mxu0
    %v874 = vadd.f32 %v847, %v873
    %875 = vdwg.mxu0
    %876 = vmatpush.msra.mxu0 0.0
    %877 = vmatpush.msra.mxu0 0.0
    %878 = vmatpush.msra.mxu0 0.0
    %879 = vmatpush.msra.mxu0 0.0
    %880 = vmatpush.msra.mxu0 0.0
    %881 = vmatpush.msra.mxu0 0.0
    %882 = vmatpush.msra.mxu0 0.0
    %883 = vmatpush.msra.mxu0 0.0
    %884 = vmatpush.msra.mxu0 0.0
    %885 = vmatpush.msra.mxu0 0.0
    %886 = vmatpush.msra.mxu0 0.0
    %887 = vmatpush.msra.mxu0 0.0
    %888 = vmatpush.msra.mxu0 %v842
    %889 = vmatpush.msra.mxu0 %v839
    %890 = vmatpush.msra.mxu0 %v836
    %891 = vmatpush.msra.mxu0 %v833
    %892 = vmatmul.f32.gmra.mxu0 %v854
    %v893 = vpop.f32.mrf.mxu0
    %v894 = vadd.f32 %v848, %v893
    %895 = vdwg.mxu0
    %896 = vmatpush.msra.mxu0 0.0
    %897 = vmatpush.msra.mxu0 0.0
    %898 = vmatpush.msra.mxu0 0.0
    %899 = vmatpush.msra.mxu0 0.0
    %900 = vmatpush.msra.mxu0 0.0
    %901 = vmatpush.msra.mxu0 0.0
    %902 = vmatpush.msra.mxu0 0.0
    %903 = vmatpush.msra.mxu0 0.0
    %904 = vmatpush.msra.mxu0 0.0
    %905 = vmatpush.msra.mxu0 0.0
    %906 = vmatpush.msra.mxu0 0.0
    %907 = vmatpush.msra.mxu0 0.0
    %908 = vmatpush.msra.mxu0 %v843
    %909 = vmatpush.msra.mxu0 %v840
    %910 = vmatpush.msra.mxu0 %v837
    %911 = vmatpush.msra.mxu0 %v834
    %912 = vmatmul.f32.gmra.mxu0 %v854
    %v913 = vpop.f32.mrf.mxu0
    %v914 = vadd.f32 %v849, %v913
    %915 = vdwg.mxu0
    %v916 = vadd.f32 %v789, %v874
    %v917 = vxor.u32 %v916, 2147483648
    %v918 = vmul.f32 %v917, 1.442695
    %v919 = vpow.pop %v918
    %v920 = vadd.f32 %v919, 1.0
    %v921 = vrcp.pop %v920
    %v922 = vmul.f32 %v920, %v921
    %v923 = vsub.f32 1.0, %v922
    %v924 = vmul.f32 %v921, %v923
    %v925 = vadd.f32 %v921, %v924
    %vm926 = vweird.f32 %v920
    %vm927 = vweird.f32 %v921
    %vm928 = vmor %vm926, %vm927
    %v929 = vsel %vm928, %v921, %v925
    %v930 = vand.u32 2147483647, %v920
    %vm931 = vcmp.eq.f32.partialorder %v930, 8.507059e+37
    %v932 = vand.u32 %v920, 2147483648
    %v933 = vor.u32 1.1754944e-38, %v932
    %v934 = vsel %vm931, %v933, %v929
    %v935 = vmul.f32 1.0, %v934
    %v936 = vadd.f32 %v809, %v894
    %v937 = vxor.u32 %v936, 2147483648
    %v938 = vmul.f32 %v937, 1.442695
    %v939 = vpow.pop %v938
    %v940 = vadd.f32 %v939, 1.0
    %v941 = vrcp.pop %v940
    %v942 = vmul.f32 %v940, %v941
    %v943 = vsub.f32 1.0, %v942
    %v944 = vmul.f32 %v941, %v943
    %v945 = vadd.f32 %v941, %v944
    %vm946 = vweird.f32 %v940
    %vm947 = vweird.f32 %v941
    %vm948 = vmor %vm946, %vm947
    %v949 = vsel %vm948, %v941, %v945
    %v950 = vand.u32 2147483647, %v940
    %vm951 = vcmp.eq.f32.partialorder %v950, 8.507059e+37
    %v952 = vand.u32 %v940, 2147483648
    %v953 = vor.u32 1.1754944e-38, %v952
    %v954 = vsel %vm951, %v953, %v949
    %v955 = vmul.f32 1.0, %v954
    %v956 = vmul.f32 %v935, %v914
    %v957 = vadd.f32 %v829, %v956
    %v958 = vtanh.pop %v957
    %v959 = vsub.f32 1.0, %v955
    %v960 = vmul.f32 %v959, %v958
    %v961 = vmul.f32 %v955, %v745
    %v962 = vadd.f32 %v960, %v961
    %963 = vst.msk [vmem:[%s16 + $0x10] sm:$0xff] %vm183, %v962
    %v964 = vld [vmem:[#allocation7] sm:$0xff]
    %v965 = vld [vmem:[#allocation7 + $0x8] sm:$0xff]
    %v966 = vld [vmem:[#allocation7 + $0x10] sm:$0xff]
    %v967 = vld [vmem:[#allocation7 + $0x18] sm:$0xff]
    %v968 = vld [vmem:[#allocation9] sm:$0x1]
    %v970 = vperm.slane %v968, 0
    %v973 = vsel %vm183, %v962, 0
    %975 = vmatpush.msra.mxu0 0.0
    %976 = vmatpush.msra.mxu0 0.0
    %977 = vmatpush.msra.mxu0 0.0
    %978 = vmatpush.msra.mxu0 0.0
    %979 = vmatpush.msra.mxu0 0.0
    %980 = vmatpush.msra.mxu0 0.0
    %981 = vmatpush.msra.mxu0 0.0
    %982 = vmatpush.msra.mxu0 0.0
    %983 = vmatpush.msra.mxu0 0.0
    %984 = vmatpush.msra.mxu0 0.0
    %985 = vmatpush.msra.mxu0 0.0
    %986 = vmatpush.msra.mxu0 0.0
    %987 = vmatpush.msra.mxu0 %v967
    %988 = vmatpush.msra.mxu0 %v966
    %989 = vmatpush.msra.mxu0 %v965
    %990 = vmatpush.msra.mxu0 %v964
    %991 = vmatmul.f32.gmra.mxu0 %v973
    %v992 = vpop.f32.mrf.mxu0
    %v993 = vadd.f32 %v970, %v992
    %994 = vdwg.mxu0
    %v995 = vsel %vm150, %v993, -inf
    %996 = vmax.xlane.f32.xlu0 %v995
    %v997 = vpop.xlane.xlu0 %996
    %v998 = vsub.f32 %v993, %v997
    %v999 = vmul.f32 %v998, 1.442695
    %v1000 = vpow.pop %v999
    %v1001 = vsel %vm150, %v1000, 0.0
    %1002 = vadd.xlane.f32.xlu0 %v1001
    %v1003 = vpop.xlane.xlu0 %1002
    %v1004 = vlog2.pop %v1003
    %v1005 = vmul.f32 %v1004, 0.6931472
    %v1006 = vadd.f32 %v1005, %v997
    %v1007 = vsub.f32 %v993, %v1006
    %1008 = vst.msk [vmem:[%s16] sm:$0xff] %vm150, %v1007
    %1009 = vst.msk [vmem:[%s16 + $0x18] sm:$0xff] %vm235, %v246
    // Predicated region
    $region86: #{attn_decoder_forward.1} parent=1 // pred_check
      _
    $region87: #{attn_decoder_forward.1} parent=1 // pred_check_branch
      %1011 = sbr.rel (0) target = $region89
    $region88: #{attn_decoder_forward.1} parent=1 // pred_region
      _
    $region89: #{attn_decoder_forward.1} parent=1 // pred_fallthru
      _
    // Predicated region
    $region90: #{attn_decoder_forward.1} parent=1 // pred_check
      _
    $region91: #{attn_decoder_forward.1} parent=1 // pred_check_branch
      %1013 = sbr.rel (0) target = $region93
    $region92: #{attn_decoder_forward.1} parent=1 // pred_region
      _
    $region93: #{attn_decoder_forward.1} parent=1 // pred_fallthru
      _
    %1014 = vsyncpa [#allocation3], 1
    %1015 = vsyncpa [#allocation5], 1
    %1016 = vsyncpa [#allocation8], 1

</llo_original>
